<compile_context>
chip_gen: v7x
topology: tpu7x:2x2x1
jax: 0.10.0
libtpu: 0.0.40
codegen_flags: <defaults>
</compile_context>

<pallas_src>
import functools

import jax
import jax.numpy as jnp
from jax.experimental import pallas as pl
from jax.experimental.pallas import tpu as pltpu


def _round_up(n, m):
    return ((n + m - 1) // m) * m


def _dqn_kernel(x_ref, w1_ref, b1_ref, w2_ref, b2_ref, out_ref):
    # fc1: (TB, S) @ (S, H) -> f32 accumulate; f32 bias-add + ReLU epilogue.
    # (A VPU broadcast-FMA outer-product fc1 is a benchmark-worthy alternative
    #  to offload the MXU push slot; kept on the MXU here for simplicity.)
    h = jnp.dot(x_ref[...], w1_ref[...], preferred_element_type=jnp.float32)
    h = jnp.maximum(h + b1_ref[...], 0.0)
    # fc2: (TB, H) @ (H, A) -> f32 accumulate; f32 bias-add.
    o = jnp.dot(h.astype(w2_ref.dtype), w2_ref[...],
                preferred_element_type=jnp.float32)
    out_ref[...] = (o + b2_ref[...]).astype(out_ref.dtype)


@functools.partial(jax.jit, static_argnames=("block_b", "min_pallas_batch"))
def dqn_forward(x, w1, b1, w2, b2, *, block_b=2048, min_pallas_batch=512):
    """x: (B, S) f32; w1: (S, H) / w2: (H, A) bf16; b1: (1, H) / b2: (1, A) f32.

    block_b: max batch-tile size (sweep 1024-4096; default 2048).
    min_pallas_batch: below this batch size, run plain XLA matmuls instead of
    a 1-step pallas_call (which would be pure fixed overhead).
    """
    B, S = x.shape
    H = w1.shape[1]
    A = w2.shape[1]

    # ---- Tiny-batch path (single-env action selection): skip Pallas. ----
    if B < min_pallas_batch:
        xf = x.astype(w1.dtype)
        h = jnp.maximum(
            jnp.dot(xf, w1, preferred_element_type=jnp.float32) + b1, 0.0)
        return (jnp.dot(h.astype(w2.dtype), w2,
                        preferred_element_type=jnp.float32) + b2)

    # ---- Replay-buffer path: fused, batch-tiled Pallas kernel. ----
    x = x.astype(w1.dtype)  # bf16 matmul operand; accumulation stays f32

    # Tile the batch. Round to 16 (bf16 sublane pack). Choosing the tile as
    # round_up(cdiv(B, 2), 16) capped at block_b guarantees >= 2 grid steps,
    # so v7x's two TensorCores both get work even for medium batches.
    tb = min(block_b, _round_up(pl.cdiv(B, 2), 16))
    b_pad = _round_up(B, tb)
    if b_pad != B:
        x = jnp.pad(x, ((0, b_pad - B), (0, 0)))
    grid = b_pad // tb

    cost = pl.CostEstimate(
        flops=2 * b_pad * (S * H + H * A),
        transcendentals=0,
        bytes_accessed=(b_pad * (S * 2 + A * 4)          # x (bf16) + out (f32)
                        + (S * H + H * A) * 2            # weights (bf16)
                        + (H + A) * 4),                  # biases (f32)
    )

    out = pl.pallas_call(
        _dqn_kernel,
        out_shape=jax.ShapeDtypeStruct((b_pad, A), jnp.float32),
        grid=(grid,),
        in_specs=[
            pl.BlockSpec((tb, S), lambda i: (i, 0)),   # x: one batch tile/step
            pl.BlockSpec((S, H), lambda i: (0, 0)),    # weights stay resident
            pl.BlockSpec((1, H), lambda i: (0, 0)),
            pl.BlockSpec((H, A), lambda i: (0, 0)),
            pl.BlockSpec((1, A), lambda i: (0, 0)),
        ],
        out_specs=pl.BlockSpec((tb, A), lambda i: (i, 0)),
        compiler_params=pltpu.CompilerParams(
            dimension_semantics=("parallel",)),        # v7x: 2 TCs split tiles
        cost_estimate=cost,
    )(x, w1, b1, w2, b2)

    return out[:B] if b_pad != B else out


def init_dqn_params(key, state_size, action_size, hidden=64, hidden_pad=128,
                    param_dtype=jnp.bfloat16):
    """PyTorch nn.Linear default init: U[-1/sqrt(fan_in), +1/sqrt(fan_in)].

    The hidden dim is zero-padded to `hidden_pad` (numerically identical to
    the 64-wide module; padded fc1 columns are zero, ReLU(0)=0, padded fc2
    rows are zero). Weights are stored (in, out) in `param_dtype`; biases stay
    f32 so the epilogue runs in f32 on all TPU generations.
    """
    k1, k2, k3, k4 = jax.random.split(key, 4)
    bound1 = 1.0 / jnp.sqrt(state_size)
    bound2 = 1.0 / jnp.sqrt(hidden)
    w1 = jax.random.uniform(k1, (state_size, hidden), jnp.float32, -bound1, bound1)
    b1 = jax.random.uniform(k2, (1, hidden), jnp.float32, -bound1, bound1)
    w2 = jax.random.uniform(k3, (hidden, action_size), jnp.float32, -bound2, bound2)
    b2 = jax.random.uniform(k4, (1, action_size), jnp.float32, -bound2, bound2)

    pad = hidden_pad - hidden
    w1 = jnp.pad(w1, ((0, 0), (0, pad))).astype(param_dtype)
    b1 = jnp.pad(b1, ((0, 0), (0, pad))).astype(jnp.float32)
    w2 = jnp.pad(w2, ((0, pad), (0, 0))).astype(param_dtype)
    b2 = b2.astype(jnp.float32)
    return w1, b1, w2, b2


def dqn_reference(x, w1, b1, w2, b2):
    """Reference applying the same operand rounding as the kernel
    (bf16 matmul operands, f32 accumulation and epilogue)."""
    xf = x.astype(w1.dtype).astype(jnp.float32)
    h = jnp.maximum(xf @ w1.astype(jnp.float32) + b1, 0.0)
    h = h.astype(w2.dtype).astype(jnp.float32)
    return h @ w2.astype(jnp.float32) + b2


if __name__ == "__main__":
    key = jax.random.PRNGKey(0)
    kx, kx2, kx3, kp = jax.random.split(key, 4)

    state_size = 8
    action_size = 4
    w1, b1, w2, b2 = init_dqn_params(kp, state_size, action_size)

    # Replay-buffer-sized batch: 2 grid steps of 1024 rows (both TCs on v7x).
    batch = 2048
    x = jax.random.normal(kx, (batch, state_size), jnp.float32)
    out = jax.block_until_ready(dqn_forward(x, w1, b1, w2, b2))
    ref = dqn_reference(x, w1, b1, w2, b2)
    assert out.shape == (batch, action_size)
    assert jnp.allclose(out, ref, atol=5e-3, rtol=5e-3), "mismatch (replay batch)"

    # Ragged batch forced through Pallas: exercises batch padding + slicing.
    batch3 = 600
    x3 = jax.random.normal(kx3, (batch3, state_size), jnp.float32)
    out3 = jax.block_until_ready(
        dqn_forward(x3, w1, b1, w2, b2, min_pallas_batch=0))
    ref3 = dqn_reference(x3, w1, b1, w2, b2)
    assert out3.shape == (batch3, action_size)
    assert jnp.allclose(out3, ref3, atol=5e-3, rtol=5e-3), "mismatch (ragged)"

    # Tiny batch (B=2, single-env action selection): XLA fallback path.
    x2 = jax.random.normal(kx2, (2, state_size), jnp.float32)
    out2 = jax.block_until_ready(dqn_forward(x2, w1, b1, w2, b2))
    ref2 = dqn_reference(x2, w1, b1, w2, b2)
    assert out2.shape == (2, action_size)
    assert jnp.allclose(out2, ref2, atol=5e-3, rtol=5e-3), "mismatch (B=2)"

    print("KERNEL_OK")
</pallas_src>

<mosaic_0001>
module attributes {stable_mosaic.version = 11 : i64} {
  func.func @_dqn_kernel(%arg0: i32, %arg1: memref<1024x8xbf16, #tpu.memory_space<vmem>>, %arg2: memref<8x128xbf16, #tpu.memory_space<vmem>>, %arg3: memref<1x128xf32, #tpu.memory_space<vmem>>, %arg4: memref<128x4xbf16, #tpu.memory_space<vmem>>, %arg5: memref<1x4xf32, #tpu.memory_space<vmem>>, %arg6: memref<1024x4xf32, #tpu.memory_space<vmem>>) attributes {dimension_semantics = [#tpu.dimension_semantics<parallel>], iteration_bounds = array<i64: 2>, scalar_prefetch = 0 : i64, scratch_operands = 0 : i64, tpu.core_type = #tpu.core_type<tc>, window_params = [{transform_indices = @transform_0, window_bounds = array<i64: 1024, 8>}, {pipeline_mode = #tpu.pipeline_mode<synchronous>, transform_indices = @transform_1, window_bounds = array<i64: 8, 128>}, {pipeline_mode = #tpu.pipeline_mode<synchronous>, transform_indices = @transform_2, window_bounds = array<i64: 1, 128>}, {pipeline_mode = #tpu.pipeline_mode<synchronous>, transform_indices = @transform_3, window_bounds = array<i64: 128, 4>}, {pipeline_mode = #tpu.pipeline_mode<synchronous>, transform_indices = @transform_4, window_bounds = array<i64: 1, 4>}, {transform_indices = @transform_5, window_bounds = array<i64: 1024, 4>}]} {
    %c0 = arith.constant 0 : index
    %c0_0 = arith.constant 0 : index
    %0 = vector.load %arg1[%c0, %c0_0] : memref<1024x8xbf16, #tpu.memory_space<vmem>>, vector<1024x8xbf16>
    %c0_1 = arith.constant 0 : index
    %c0_2 = arith.constant 0 : index
    %1 = vector.load %arg2[%c0_1, %c0_2] : memref<8x128xbf16, #tpu.memory_space<vmem>>, vector<8x128xbf16>
    %cst = arith.constant dense<0.000000e+00> : vector<1024x128xf32>
    %2 = tpu.matmul %0, %1, %cst {dimension_numbers = #tpu.dot_dimension_numbers<[1], [0], [0], [1], [0, 0, 1, 1], [], []>} : vector<1024x8xbf16>, vector<8x128xbf16>, vector<1024x128xf32> -> vector<1024x128xf32>
    %c0_3 = arith.constant 0 : index
    %c0_4 = arith.constant 0 : index
    %3 = vector.load %arg3[%c0_3, %c0_4] : memref<1x128xf32, #tpu.memory_space<vmem>>, vector<1x128xf32>
    %4 = vector.broadcast %3 : vector<1x128xf32> to vector<1024x128xf32>
    %5 = arith.addf %2, %4 : vector<1024x128xf32>
    %cst_5 = arith.constant 0.000000e+00 : f32
    %6 = vector.broadcast %cst_5 : f32 to vector<1024x128xf32>
    %7 = arith.maximumf %5, %6 : vector<1024x128xf32>
    %8 = arith.truncf %7 : vector<1024x128xf32> to vector<1024x128xbf16>
    %c0_6 = arith.constant 0 : index
    %c0_7 = arith.constant 0 : index
    %9 = vector.load %arg4[%c0_6, %c0_7] : memref<128x4xbf16, #tpu.memory_space<vmem>>, vector<128x4xbf16>
    %cst_8 = arith.constant dense<0.000000e+00> : vector<1024x4xf32>
    %10 = tpu.matmul %8, %9, %cst_8 {dimension_numbers = #tpu.dot_dimension_numbers<[1], [0], [0], [1], [0, 0, 1, 1], [], []>} : vector<1024x128xbf16>, vector<128x4xbf16>, vector<1024x4xf32> -> vector<1024x4xf32>
    %c0_9 = arith.constant 0 : index
    %c0_10 = arith.constant 0 : index
    %11 = vector.load %arg5[%c0_9, %c0_10] : memref<1x4xf32, #tpu.memory_space<vmem>>, vector<1x4xf32>
    %12 = vector.broadcast %11 : vector<1x4xf32> to vector<1024x4xf32>
    %13 = arith.addf %10, %12 : vector<1024x4xf32>
    %c0_11 = arith.constant 0 : index
    %c0_12 = arith.constant 0 : index
    %14 = vector.load %arg6[%c0_11, %c0_12] : memref<1024x4xf32, #tpu.memory_space<vmem>>, vector<1024x4xf32>
    tpu.vector_store %arg6[%c0_11, %c0_12], %13 {strides = array<i32>} : memref<1024x4xf32, #tpu.memory_space<vmem>>, vector<1024x4xf32>,
    return
  }
  func.func @transform_0(%arg0: i32) -> (i32, i32) {
    %c0_i32 = arith.constant 0 : i32
    %c0_i32_0 = arith.constant 0 : i32
    return %arg0, %c0_i32 : i32, i32
  }
  func.func @transform_1(%arg0: i32) -> (i32, i32) {
    %c0_i32 = arith.constant 0 : i32
    %c0_i32_0 = arith.constant 0 : i32
    %c0_i32_1 = arith.constant 0 : i32
    return %c0_i32, %c0_i32_0 : i32, i32
  }
  func.func @transform_2(%arg0: i32) -> (i32, i32) {
    %c0_i32 = arith.constant 0 : i32
    %c0_i32_0 = arith.constant 0 : i32
    %c0_i32_1 = arith.constant 0 : i32
    return %c0_i32, %c0_i32_0 : i32, i32
  }
  func.func @transform_3(%arg0: i32) -> (i32, i32) {
    %c0_i32 = arith.constant 0 : i32
    %c0_i32_0 = arith.constant 0 : i32
    %c0_i32_1 = arith.constant 0 : i32
    return %c0_i32, %c0_i32_0 : i32, i32
  }
  func.func @transform_4(%arg0: i32) -> (i32, i32) {
    %c0_i32 = arith.constant 0 : i32
    %c0_i32_0 = arith.constant 0 : i32
    %c0_i32_1 = arith.constant 0 : i32
    return %c0_i32, %c0_i32_0 : i32, i32
  }
  func.func @transform_5(%arg0: i32) -> (i32, i32) {
    %c0_i32 = arith.constant 0 : i32
    %c0_i32_0 = arith.constant 0 : i32
    return %arg0, %c0_i32 : i32, i32
  }
}

</mosaic_0001>

<llo_original>
// kernel: dqn_forward.1
$region0: #{dqn_forward.1}
  #allocation0 [shape = 'u32[]', space=smem, size = 0x4, offset = 0x4, fixed_abs, tag = 'smem constant byte address 0x4 - core index']
  #allocation1 [shape = 'u32[144,128]{1,0:T(1,128)}', space=vmem, size = 0x12000, scoped, tag = 'internal scratch']
  %s0 = inlined_call_operand.vmem [shape: bf16[2048,8], index: 0, kind: input, shape index: {}]
  %s1 = inlined_call_operand.vmem [shape: bf16[8,128], index: 1, kind: input, shape index: {}]
  %s2 = inlined_call_operand.vmem [shape: f32[1,128], index: 2, kind: input, shape index: {}]
  %s3 = inlined_call_operand.vmem [shape: bf16[128,4], index: 3, kind: input, shape index: {}]
  %s4 = inlined_call_operand.vmem [shape: f32[1,4], index: 4, kind: input, shape index: {}]
  %s5 = inlined_call_operand.vmem [shape: f32[2048,4], index: 5, kind: output, shape index: {}]
  %s6 = sld [smem:[#allocation0]]
  $region53: #{dqn_forward.1} parent=0
    _
  %s8 = ssub.s32 1, %s6
  %s9 = scalar_select 0, %s8, %s6
  loop: start=0, step=1, limit=4
  $region2: #{dqn_forward.1} parent=0 // loop_pre_header
    _
  $region3: #{dqn_forward.1} parent=0 // loop_header
    %s11 = sphi 0, %s15
    %p12 = scmp.ge.s32.totalorder %s11, 4
    %s21 = sphi 0, %s23
    %s24 = sphi 0, %s21
    %s25 = sphi 0, %s24
    %s41 = sphi 0, %s25
    %s45 = sphi 0, %s45
    %s47 = sphi 0, %s45
    %s48 = sphi 0, %s47
    %s62 = sphi 0, %s48
    %s66 = sphi 0, %s66
    %s68 = sphi 0, %s66
    %s69 = sphi 0, %s68
    %s83 = sphi 0, %s69
    %s87 = sphi 0, %s87
    %s89 = sphi 0, %s87
    %s90 = sphi 0, %s89
    %s104 = sphi 0, %s90
    %s108 = sphi 0, %s108
    %s110 = sphi 0, %s108
    %s111 = sphi 0, %s110
    %s125 = sphi 0, %s111
    %s131 = sphi 0, %s133
    %s134 = sphi 0, %s131
    %s135 = sphi 0, %s134
    %s151 = sphi 0, %s135
  $region4: #{dqn_forward.1} parent=0 // loop_header_branch
    %14 = sbr.rel (%p12) target = $region8
  $region5: #{dqn_forward.1} parent=0 // loop_body
    %s16 = ssub.s32 %s11, 1
    %s17 = ssub.s32 %s11, 2
    %s18 = sadd.s32 %s11, 1
    %s19 = ssub.s32 %s11, %s18
    %p20 = scmp.eq.s32.totalorder %s19, 0
    %s22 = sadd.s32 %s21, 1
    %s23 = scalar_select %p20, %s21, %s22
    %p26 = pneg %p20
    %p27 = scmp.eq.s32.totalorder %s11, 1
    %p28 = por %p26, %p27
    %p29 = scmp.ne.s32.totalorder %s21, %s24
    %p30 = scmp.eq.s32.totalorder %s11, 0
    %p31 = por %p29, %p30
    %p32 = scmp.ne.s32.totalorder %s21, %s24
    %p33 = scmp.eq.s32.totalorder %s16, 1
    %p34 = por %p32, %p33
    %p35 = scmp.ne.s32.totalorder %s24, %s25
    %p36 = scmp.eq.s32.totalorder %s16, 0
    %p37 = por %p35, %p36
    %p38 = scmp.ne.s32.totalorder %s24, %s25
    %p39 = scmp.eq.s32.totalorder %s17, 1
    %p40 = por %p38, %p39
    %p42 = scmp.ne.s32.totalorder %s25, %s41
    %p43 = scmp.eq.s32.totalorder %s17, 0
    %p44 = por %p42, %p43
    %s46 = sadd.s32 %s45, 1
    %p49 = scmp.eq.s32.totalorder %s11, 1
    %p50 = scmp.ne.s32.totalorder %s45, %s47
    %p51 = scmp.eq.s32.totalorder %s11, 0
    %p52 = por %p50, %p51
    %p53 = scmp.ne.s32.totalorder %s45, %s47
    %p54 = scmp.eq.s32.totalorder %s16, 1
    %p55 = por %p53, %p54
    %p56 = scmp.ne.s32.totalorder %s47, %s48
    %p57 = scmp.eq.s32.totalorder %s16, 0
    %p58 = por %p56, %p57
    %p59 = scmp.ne.s32.totalorder %s47, %s48
    %p60 = scmp.eq.s32.totalorder %s17, 1
    %p61 = por %p59, %p60
    %p63 = scmp.ne.s32.totalorder %s48, %s62
    %p64 = scmp.eq.s32.totalorder %s17, 0
    %p65 = por %p63, %p64
    %s67 = sadd.s32 %s66, 1
    %p70 = scmp.eq.s32.totalorder %s11, 1
    %p71 = scmp.ne.s32.totalorder %s66, %s68
    %p72 = scmp.eq.s32.totalorder %s11, 0
    %p73 = por %p71, %p72
    %p74 = scmp.ne.s32.totalorder %s66, %s68
    %p75 = scmp.eq.s32.totalorder %s16, 1
    %p76 = por %p74, %p75
    %p77 = scmp.ne.s32.totalorder %s68, %s69
    %p78 = scmp.eq.s32.totalorder %s16, 0
    %p79 = por %p77, %p78
    %p80 = scmp.ne.s32.totalorder %s68, %s69
    %p81 = scmp.eq.s32.totalorder %s17, 1
    %p82 = por %p80, %p81
    %p84 = scmp.ne.s32.totalorder %s69, %s83
    %p85 = scmp.eq.s32.totalorder %s17, 0
    %p86 = por %p84, %p85
    %s88 = sadd.s32 %s87, 1
    %p91 = scmp.eq.s32.totalorder %s11, 1
    %p92 = scmp.ne.s32.totalorder %s87, %s89
    %p93 = scmp.eq.s32.totalorder %s11, 0
    %p94 = por %p92, %p93
    %p95 = scmp.ne.s32.totalorder %s87, %s89
    %p96 = scmp.eq.s32.totalorder %s16, 1
    %p97 = por %p95, %p96
    %p98 = scmp.ne.s32.totalorder %s89, %s90
    %p99 = scmp.eq.s32.totalorder %s16, 0
    %p100 = por %p98, %p99
    %p101 = scmp.ne.s32.totalorder %s89, %s90
    %p102 = scmp.eq.s32.totalorder %s17, 1
    %p103 = por %p101, %p102
    %p105 = scmp.ne.s32.totalorder %s90, %s104
    %p106 = scmp.eq.s32.totalorder %s17, 0
    %p107 = por %p105, %p106
    %s109 = sadd.s32 %s108, 1
    %p112 = scmp.eq.s32.totalorder %s11, 1
    %p113 = scmp.ne.s32.totalorder %s108, %s110
    %p114 = scmp.eq.s32.totalorder %s11, 0
    %p115 = por %p113, %p114
    %p116 = scmp.ne.s32.totalorder %s108, %s110
    %p117 = scmp.eq.s32.totalorder %s16, 1
    %p118 = por %p116, %p117
    %p119 = scmp.ne.s32.totalorder %s110, %s111
    %p120 = scmp.eq.s32.totalorder %s16, 0
    %p121 = por %p119, %p120
    %p122 = scmp.ne.s32.totalorder %s110, %s111
    %p123 = scmp.eq.s32.totalorder %s17, 1
    %p124 = por %p122, %p123
    %p126 = scmp.ne.s32.totalorder %s111, %s125
    %p127 = scmp.eq.s32.totalorder %s17, 0
    %p128 = por %p126, %p127
    %s129 = ssub.s32 %s11, %s18
    %p130 = scmp.eq.s32.totalorder %s129, 0
    %s132 = sadd.s32 %s131, 1
    %s133 = scalar_select %p130, %s131, %s132
    %p136 = pneg %p130
    %p137 = scmp.eq.s32.totalorder %s11, 1
    %p138 = por %p136, %p137
    %p139 = scmp.ne.s32.totalorder %s131, %s134
    %p140 = scmp.eq.s32.totalorder %s11, 0
    %p141 = por %p139, %p140
    %p142 = scmp.ne.s32.totalorder %s131, %s134
    %p143 = scmp.eq.s32.totalorder %s16, 1
    %p144 = por %p142, %p143
    %p145 = scmp.ne.s32.totalorder %s134, %s135
    %p146 = scmp.eq.s32.totalorder %s16, 0
    %p147 = por %p145, %p146
    %p148 = scmp.ne.s32.totalorder %s134, %s135
    %p149 = scmp.eq.s32.totalorder %s17, 1
    %p150 = por %p148, %p149
    %p152 = scmp.ne.s32.totalorder %s135, %s151
    %p153 = scmp.eq.s32.totalorder %s17, 0
    %p154 = por %p152, %p153
    %p155 = scmp.le.s32.totalorder 1, %s11
    %p156 = scmp.lt.s32.totalorder %s11, 3
    %p157 = pnand %p155, %p156
    %p158 = pneg %p157
    // Predicated region
    $region9: #{dqn_forward.1} parent=5 // pred_check
      _
    $region10: #{dqn_forward.1} parent=5 // pred_check_branch
      %160 = sbr.rel (%p157) target = $region12
    $region11: #{dqn_forward.1} parent=5 // pred_region
      %s161 = ssub.s32 %s11, 1
      // Predicated region
      $region13: #{dqn_forward.1} parent=11 // pred_check
        %p162 = pneg %p58
      $region14: #{dqn_forward.1} parent=11 // pred_check_branch
        %164 = sbr.rel (%p162) target = $region16
      $region15: #{dqn_forward.1} parent=11 // pred_region
        _
      $region16: #{dqn_forward.1} parent=11 // pred_fallthru
        _
      // Predicated region
      $region17: #{dqn_forward.1} parent=11 // pred_check
        %p165 = pneg %p79
      $region18: #{dqn_forward.1} parent=11 // pred_check_branch
        %167 = sbr.rel (%p165) target = $region20
      $region19: #{dqn_forward.1} parent=11 // pred_region
        _
      $region20: #{dqn_forward.1} parent=11 // pred_fallthru
        _
      // Predicated region
      $region21: #{dqn_forward.1} parent=11 // pred_check
        %p168 = pneg %p100
      $region22: #{dqn_forward.1} parent=11 // pred_check_branch
        %170 = sbr.rel (%p168) target = $region24
      $region23: #{dqn_forward.1} parent=11 // pred_region
        _
      $region24: #{dqn_forward.1} parent=11 // pred_fallthru
        _
      // Predicated region
      $region25: #{dqn_forward.1} parent=11 // pred_check
        %p171 = pneg %p121
      $region26: #{dqn_forward.1} parent=11 // pred_check_branch
        %173 = sbr.rel (%p171) target = $region28
      $region27: #{dqn_forward.1} parent=11 // pred_region
        _
      $region28: #{dqn_forward.1} parent=11 // pred_fallthru
        _
    $region12: #{dqn_forward.1} parent=5 // pred_fallthru
      _
    %p174 = scmp.lt.s32.totalorder %s11, 2
    // Predicated region
    $region29: #{dqn_forward.1} parent=5 // pred_check
      %p175 = pneg %p174
    $region30: #{dqn_forward.1} parent=5 // pred_check_branch
      %177 = sbr.rel (%p175) target = $region32
    $region31: #{dqn_forward.1} parent=5 // pred_region
      // Predicated region
      $region33: #{dqn_forward.1} parent=31 // pred_check
        %p178 = pneg %p31
      $region34: #{dqn_forward.1} parent=31 // pred_check_branch
        %180 = sbr.rel (%p178) target = $region36
      $region35: #{dqn_forward.1} parent=31 // pred_region
        %s181 = smul.u32 128, %s11
        %p182 = scmp.lt.s32.totalorder %s181, 255
        %s183 = scalar_select %p182, %s181, 255
        %s184 = smul.addr %s183, 4
        %s185 = scalar_lea.vmem %s0, %s184
        %s186 = smul.u32 128, %s11
      $region36: #{dqn_forward.1} parent=31 // pred_fallthru
        _
    $region32: #{dqn_forward.1} parent=5 // pred_fallthru
      _
    %p187 = scmp.le.s32.totalorder 1, %s11
    %p188 = scmp.lt.s32.totalorder %s11, 3
    %p189 = pnand %p187, %p188
    %p190 = pneg %p189
    // Predicated region
    $region37: #{dqn_forward.1} parent=5 // pred_check
      _
    $region38: #{dqn_forward.1} parent=5 // pred_check_branch
      %192 = sbr.rel (%p189) target = $region40
    $region39: #{dqn_forward.1} parent=5 // pred_region
      %s193 = ssub.s32 %s11, 1
      %s194 = smul.u32 128, %s16
      %p195 = scmp.lt.s32.totalorder %s194, 255
      %s196 = scalar_select %p195, %s194, 255
      %s197 = smul.addr %s196, 4
      %s198 = scalar_lea.vmem %s0, %s197
      %p199 = pneg %p37
      %p200 = pneg %p34
      %p201 = pneg %p58
      %p202 = pneg %p55
      %p203 = pneg %p79
      %p204 = pneg %p76
      %p205 = pneg %p100
      %p206 = pneg %p97
      %p207 = pneg %p121
      %p208 = pneg %p118
      %p209 = pneg %p147
      %p210 = pneg %p144
      %s211 = smul.u32 128, %s16
      %p212 = scmp.lt.s32.totalorder %s211, 255
      %s213 = scalar_select %p212, %s211, 255
      %s214 = smul.addr %s213, 8
      %s215 = scalar_lea.vmem %s5, %s214
      %s216 = smul.u32 128, %s16
      %p217 = scmp.lt.s32.totalorder %s216, 255
      %s218 = scalar_select %p217, %s216, 255
      %s219 = smul.addr %s218, 4
      %s220 = scalar_lea.vmem %s0, %s219
      %s221 = smul.u32 128, %s16
      %s222 = smul.u32 128, %s16
      %p223 = scmp.lt.s32.totalorder %s222, 255
      %s224 = scalar_select %p223, %s222, 255
      %s225 = smul.addr %s224, 8
      %s226 = scalar_lea.vmem %s5, %s225
      %s227 = smul.u32 128, %s16
      %v229 = vld [vmem:[%s220] sm:$0xf]
      %v230 = vld [vmem:[%s220 + $0x4] sm:$0xf]
      %v231 = vld [vmem:[%s220 + $0x8] sm:$0xf]
      %v232 = vld [vmem:[%s220 + $0xc] sm:$0xf]
      %v233 = vld [vmem:[%s220 + $0x10] sm:$0xf]
      %v234 = vld [vmem:[%s220 + $0x14] sm:$0xf]
      %v235 = vld [vmem:[%s220 + $0x18] sm:$0xf]
      %v236 = vld [vmem:[%s220 + $0x1c] sm:$0xf]
      %v237 = vld [vmem:[%s220 + $0x20] sm:$0xf]
      %v238 = vld [vmem:[%s220 + $0x24] sm:$0xf]
      %v239 = vld [vmem:[%s220 + $0x28] sm:$0xf]
      %v240 = vld [vmem:[%s220 + $0x2c] sm:$0xf]
      %v241 = vld [vmem:[%s220 + $0x30] sm:$0xf]
      %v242 = vld [vmem:[%s220 + $0x34] sm:$0xf]
      %v243 = vld [vmem:[%s220 + $0x38] sm:$0xf]
      %v244 = vld [vmem:[%s220 + $0x3c] sm:$0xf]
      %v245 = vld [vmem:[%s220 + $0x40] sm:$0xf]
      %v246 = vld [vmem:[%s220 + $0x44] sm:$0xf]
      %v247 = vld [vmem:[%s220 + $0x48] sm:$0xf]
      %v248 = vld [vmem:[%s220 + $0x4c] sm:$0xf]
      %v249 = vld [vmem:[%s220 + $0x50] sm:$0xf]
      %v250 = vld [vmem:[%s220 + $0x54] sm:$0xf]
      %v251 = vld [vmem:[%s220 + $0x58] sm:$0xf]
      %v252 = vld [vmem:[%s220 + $0x5c] sm:$0xf]
      %v253 = vld [vmem:[%s220 + $0x60] sm:$0xf]
      %v254 = vld [vmem:[%s220 + $0x64] sm:$0xf]
      %v255 = vld [vmem:[%s220 + $0x68] sm:$0xf]
      %v256 = vld [vmem:[%s220 + $0x6c] sm:$0xf]
      %v257 = vld [vmem:[%s220 + $0x70] sm:$0xf]
      %v258 = vld [vmem:[%s220 + $0x74] sm:$0xf]
      %v259 = vld [vmem:[%s220 + $0x78] sm:$0xf]
      %v260 = vld [vmem:[%s220 + $0x7c] sm:$0xf]
      %v261 = vld [vmem:[%s220 + $0x80] sm:$0xf]
      %v262 = vld [vmem:[%s220 + $0x84] sm:$0xf]
      %v263 = vld [vmem:[%s220 + $0x88] sm:$0xf]
      %v264 = vld [vmem:[%s220 + $0x8c] sm:$0xf]
      %v265 = vld [vmem:[%s220 + $0x90] sm:$0xf]
      %v266 = vld [vmem:[%s220 + $0x94] sm:$0xf]
      %v267 = vld [vmem:[%s220 + $0x98] sm:$0xf]
      %v268 = vld [vmem:[%s220 + $0x9c] sm:$0xf]
      %v269 = vld [vmem:[%s220 + $0xa0] sm:$0xf]
      %v270 = vld [vmem:[%s220 + $0xa4] sm:$0xf]
      %v271 = vld [vmem:[%s220 + $0xa8] sm:$0xf]
      %v272 = vld [vmem:[%s220 + $0xac] sm:$0xf]
      %v273 = vld [vmem:[%s220 + $0xb0] sm:$0xf]
      %v274 = vld [vmem:[%s220 + $0xb4] sm:$0xf]
      %v275 = vld [vmem:[%s220 + $0xb8] sm:$0xf]
      %v276 = vld [vmem:[%s220 + $0xbc] sm:$0xf]
      %v277 = vld [vmem:[%s220 + $0xc0] sm:$0xf]
      %v278 = vld [vmem:[%s220 + $0xc4] sm:$0xf]
      %v279 = vld [vmem:[%s220 + $0xc8] sm:$0xf]
      %v280 = vld [vmem:[%s220 + $0xcc] sm:$0xf]
      %v281 = vld [vmem:[%s220 + $0xd0] sm:$0xf]
      %v282 = vld [vmem:[%s220 + $0xd4] sm:$0xf]
      %v283 = vld [vmem:[%s220 + $0xd8] sm:$0xf]
      %v284 = vld [vmem:[%s220 + $0xdc] sm:$0xf]
      %v285 = vld [vmem:[%s220 + $0xe0] sm:$0xf]
      %v286 = vld [vmem:[%s220 + $0xe4] sm:$0xf]
      %v287 = vld [vmem:[%s220 + $0xe8] sm:$0xf]
      %v288 = vld [vmem:[%s220 + $0xec] sm:$0xf]
      %v289 = vld [vmem:[%s220 + $0xf0] sm:$0xf]
      %v290 = vld [vmem:[%s220 + $0xf4] sm:$0xf]
      %v291 = vld [vmem:[%s220 + $0xf8] sm:$0xf]
      %v292 = vld [vmem:[%s220 + $0xfc] sm:$0xf]
      %v293 = vld [vmem:[%s220 + $0x100] sm:$0xf]
      %v294 = vld [vmem:[%s220 + $0x104] sm:$0xf]
      %v295 = vld [vmem:[%s220 + $0x108] sm:$0xf]
      %v296 = vld [vmem:[%s220 + $0x10c] sm:$0xf]
      %v297 = vld [vmem:[%s220 + $0x110] sm:$0xf]
      %v298 = vld [vmem:[%s220 + $0x114] sm:$0xf]
      %v299 = vld [vmem:[%s220 + $0x118] sm:$0xf]
      %v300 = vld [vmem:[%s220 + $0x11c] sm:$0xf]
      %v301 = vld [vmem:[%s220 + $0x120] sm:$0xf]
      %v302 = vld [vmem:[%s220 + $0x124] sm:$0xf]
      %v303 = vld [vmem:[%s220 + $0x128] sm:$0xf]
      %v304 = vld [vmem:[%s220 + $0x12c] sm:$0xf]
      %v305 = vld [vmem:[%s220 + $0x130] sm:$0xf]
      %v306 = vld [vmem:[%s220 + $0x134] sm:$0xf]
      %v307 = vld [vmem:[%s220 + $0x138] sm:$0xf]
      %v308 = vld [vmem:[%s220 + $0x13c] sm:$0xf]
      %v309 = vld [vmem:[%s220 + $0x140] sm:$0xf]
      %v310 = vld [vmem:[%s220 + $0x144] sm:$0xf]
      %v311 = vld [vmem:[%s220 + $0x148] sm:$0xf]
      %v312 = vld [vmem:[%s220 + $0x14c] sm:$0xf]
      %v313 = vld [vmem:[%s220 + $0x150] sm:$0xf]
      %v314 = vld [vmem:[%s220 + $0x154] sm:$0xf]
      %v315 = vld [vmem:[%s220 + $0x158] sm:$0xf]
      %v316 = vld [vmem:[%s220 + $0x15c] sm:$0xf]
      %v317 = vld [vmem:[%s220 + $0x160] sm:$0xf]
      %v318 = vld [vmem:[%s220 + $0x164] sm:$0xf]
      %v319 = vld [vmem:[%s220 + $0x168] sm:$0xf]
      %v320 = vld [vmem:[%s220 + $0x16c] sm:$0xf]
      %v321 = vld [vmem:[%s220 + $0x170] sm:$0xf]
      %v322 = vld [vmem:[%s220 + $0x174] sm:$0xf]
      %v323 = vld [vmem:[%s220 + $0x178] sm:$0xf]
      %v324 = vld [vmem:[%s220 + $0x17c] sm:$0xf]
      %v325 = vld [vmem:[%s220 + $0x180] sm:$0xf]
      %v326 = vld [vmem:[%s220 + $0x184] sm:$0xf]
      %v327 = vld [vmem:[%s220 + $0x188] sm:$0xf]
      %v328 = vld [vmem:[%s220 + $0x18c] sm:$0xf]
      %v329 = vld [vmem:[%s220 + $0x190] sm:$0xf]
      %v330 = vld [vmem:[%s220 + $0x194] sm:$0xf]
      %v331 = vld [vmem:[%s220 + $0x198] sm:$0xf]
      %v332 = vld [vmem:[%s220 + $0x19c] sm:$0xf]
      %v333 = vld [vmem:[%s220 + $0x1a0] sm:$0xf]
      %v334 = vld [vmem:[%s220 + $0x1a4] sm:$0xf]
      %v335 = vld [vmem:[%s220 + $0x1a8] sm:$0xf]
      %v336 = vld [vmem:[%s220 + $0x1ac] sm:$0xf]
      %v337 = vld [vmem:[%s220 + $0x1b0] sm:$0xf]
      %v338 = vld [vmem:[%s220 + $0x1b4] sm:$0xf]
      %v339 = vld [vmem:[%s220 + $0x1b8] sm:$0xf]
      %v340 = vld [vmem:[%s220 + $0x1bc] sm:$0xf]
      %v341 = vld [vmem:[%s220 + $0x1c0] sm:$0xf]
      %v342 = vld [vmem:[%s220 + $0x1c4] sm:$0xf]
      %v343 = vld [vmem:[%s220 + $0x1c8] sm:$0xf]
      %v344 = vld [vmem:[%s220 + $0x1cc] sm:$0xf]
      %v345 = vld [vmem:[%s220 + $0x1d0] sm:$0xf]
      %v346 = vld [vmem:[%s220 + $0x1d4] sm:$0xf]
      %v347 = vld [vmem:[%s220 + $0x1d8] sm:$0xf]
      %v348 = vld [vmem:[%s220 + $0x1dc] sm:$0xf]
      %v349 = vld [vmem:[%s220 + $0x1e0] sm:$0xf]
      %v350 = vld [vmem:[%s220 + $0x1e4] sm:$0xf]
      %v351 = vld [vmem:[%s220 + $0x1e8] sm:$0xf]
      %v352 = vld [vmem:[%s220 + $0x1ec] sm:$0xf]
      %v353 = vld [vmem:[%s220 + $0x1f0] sm:$0xf]
      %v354 = vld [vmem:[%s220 + $0x1f4] sm:$0xf]
      %v355 = vld [vmem:[%s220 + $0x1f8] sm:$0xf]
      %v356 = vld [vmem:[%s220 + $0x1fc] sm:$0xf]
      %v357 = vld [vmem:[%s1] sm:$0xf]
      %v358 = vld [vmem:[%s2] sm:$0x1]
      %v360 = vlaneseq
      %v361 = vshrl.u32 %v360, 7
      %v362 = vsub.s32 0, %v361
      %v363 = vrot.slane %v358, %v362
      %v493 = vunpack.c.l.b16 %v229
      %v494 = vunpack.c.l.b16 %v230
      %v495 = vunpack.c.l.b16 %v231
      %v496 = vunpack.c.l.b16 %v232
      %v497 = vunpack.c.l.b16 %v233
      %v498 = vunpack.c.l.b16 %v234
      %v499 = vunpack.c.l.b16 %v235
      %v500 = vunpack.c.l.b16 %v236
      %v501 = vunpack.c.l.b16 %v237
      %v502 = vunpack.c.l.b16 %v238
      %v503 = vunpack.c.l.b16 %v239
      %v504 = vunpack.c.l.b16 %v240
      %v505 = vunpack.c.l.b16 %v241
      %v506 = vunpack.c.l.b16 %v242
      %v507 = vunpack.c.l.b16 %v243
      %v508 = vunpack.c.l.b16 %v244
      %v509 = vunpack.c.l.b16 %v245
      %v510 = vunpack.c.l.b16 %v246
      %v511 = vunpack.c.l.b16 %v247
      %v512 = vunpack.c.l.b16 %v248
      %v513 = vunpack.c.l.b16 %v249
      %v514 = vunpack.c.l.b16 %v250
      %v515 = vunpack.c.l.b16 %v251
      %v516 = vunpack.c.l.b16 %v252
      %v517 = vunpack.c.l.b16 %v253
      %v518 = vunpack.c.l.b16 %v254
      %v519 = vunpack.c.l.b16 %v255
      %v520 = vunpack.c.l.b16 %v256
      %v521 = vunpack.c.l.b16 %v257
      %v522 = vunpack.c.l.b16 %v258
      %v523 = vunpack.c.l.b16 %v259
      %v524 = vunpack.c.l.b16 %v260
      %v525 = vunpack.c.l.b16 %v261
      %v526 = vunpack.c.l.b16 %v262
      %v527 = vunpack.c.l.b16 %v263
      %v528 = vunpack.c.l.b16 %v264
      %v529 = vunpack.c.l.b16 %v265
      %v530 = vunpack.c.l.b16 %v266
      %v531 = vunpack.c.l.b16 %v267
      %v532 = vunpack.c.l.b16 %v268
      %v533 = vunpack.c.l.b16 %v269
      %v534 = vunpack.c.l.b16 %v270
      %v535 = vunpack.c.l.b16 %v271
      %v536 = vunpack.c.l.b16 %v272
      %v537 = vunpack.c.l.b16 %v273
      %v538 = vunpack.c.l.b16 %v274
      %v539 = vunpack.c.l.b16 %v275
      %v540 = vunpack.c.l.b16 %v276
      %v541 = vunpack.c.l.b16 %v277
      %v542 = vunpack.c.l.b16 %v278
      %v543 = vunpack.c.l.b16 %v279
      %v544 = vunpack.c.l.b16 %v280
      %v545 = vunpack.c.l.b16 %v281
      %v546 = vunpack.c.l.b16 %v282
      %v547 = vunpack.c.l.b16 %v283
      %v548 = vunpack.c.l.b16 %v284
      %v549 = vunpack.c.l.b16 %v285
      %v550 = vunpack.c.l.b16 %v286
      %v551 = vunpack.c.l.b16 %v287
      %v552 = vunpack.c.l.b16 %v288
      %v553 = vunpack.c.l.b16 %v289
      %v554 = vunpack.c.l.b16 %v290
      %v555 = vunpack.c.l.b16 %v291
      %v556 = vunpack.c.l.b16 %v292
      %v557 = vunpack.c.l.b16 %v293
      %v558 = vunpack.c.l.b16 %v294
      %v559 = vunpack.c.l.b16 %v295
      %v560 = vunpack.c.l.b16 %v296
      %v561 = vunpack.c.l.b16 %v297
      %v562 = vunpack.c.l.b16 %v298
      %v563 = vunpack.c.l.b16 %v299
      %v564 = vunpack.c.l.b16 %v300
      %v565 = vunpack.c.l.b16 %v301
      %v566 = vunpack.c.l.b16 %v302
      %v567 = vunpack.c.l.b16 %v303
      %v568 = vunpack.c.l.b16 %v304
      %v569 = vunpack.c.l.b16 %v305
      %v570 = vunpack.c.l.b16 %v306
      %v571 = vunpack.c.l.b16 %v307
      %v572 = vunpack.c.l.b16 %v308
      %v573 = vunpack.c.l.b16 %v309
      %v574 = vunpack.c.l.b16 %v310
      %v575 = vunpack.c.l.b16 %v311
      %v576 = vunpack.c.l.b16 %v312
      %v577 = vunpack.c.l.b16 %v313
      %v578 = vunpack.c.l.b16 %v314
      %v579 = vunpack.c.l.b16 %v315
      %v580 = vunpack.c.l.b16 %v316
      %v581 = vunpack.c.l.b16 %v317
      %v582 = vunpack.c.l.b16 %v318
      %v583 = vunpack.c.l.b16 %v319
      %v584 = vunpack.c.l.b16 %v320
      %v585 = vunpack.c.l.b16 %v321
      %v586 = vunpack.c.l.b16 %v322
      %v587 = vunpack.c.l.b16 %v323
      %v588 = vunpack.c.l.b16 %v324
      %v589 = vunpack.c.l.b16 %v325
      %v590 = vunpack.c.l.b16 %v326
      %v591 = vunpack.c.l.b16 %v327
      %v592 = vunpack.c.l.b16 %v328
      %v593 = vunpack.c.l.b16 %v329
      %v594 = vunpack.c.l.b16 %v330
      %v595 = vunpack.c.l.b16 %v331
      %v596 = vunpack.c.l.b16 %v332
      %v597 = vunpack.c.l.b16 %v333
      %v598 = vunpack.c.l.b16 %v334
      %v599 = vunpack.c.l.b16 %v335
      %v600 = vunpack.c.l.b16 %v336
      %v601 = vunpack.c.l.b16 %v337
      %v602 = vunpack.c.l.b16 %v338
      %v603 = vunpack.c.l.b16 %v339
      %v604 = vunpack.c.l.b16 %v340
      %v605 = vunpack.c.l.b16 %v341
      %v606 = vunpack.c.l.b16 %v342
      %v607 = vunpack.c.l.b16 %v343
      %v608 = vunpack.c.l.b16 %v344
      %v609 = vunpack.c.l.b16 %v345
      %v610 = vunpack.c.l.b16 %v346
      %v611 = vunpack.c.l.b16 %v347
      %v612 = vunpack.c.l.b16 %v348
      %v613 = vunpack.c.l.b16 %v349
      %v614 = vunpack.c.l.b16 %v350
      %v615 = vunpack.c.l.b16 %v351
      %v616 = vunpack.c.l.b16 %v352
      %v617 = vunpack.c.l.b16 %v353
      %v618 = vunpack.c.l.b16 %v354
      %v619 = vunpack.c.l.b16 %v355
      %v620 = vunpack.c.l.b16 %v356
      %v621 = vpack.c.b16 %v494, %v493
      %v622 = vpack.c.b16 %v496, %v495
      %v623 = vpack.c.b16 %v498, %v497
      %v624 = vpack.c.b16 %v500, %v499
      %v625 = vpack.c.b16 %v502, %v501
      %v626 = vpack.c.b16 %v504, %v503
      %v627 = vpack.c.b16 %v506, %v505
      %v628 = vpack.c.b16 %v508, %v507
      %v629 = vpack.c.b16 %v510, %v509
      %v630 = vpack.c.b16 %v512, %v511
      %v631 = vpack.c.b16 %v514, %v513
      %v632 = vpack.c.b16 %v516, %v515
      %v633 = vpack.c.b16 %v518, %v517
      %v634 = vpack.c.b16 %v520, %v519
      %v635 = vpack.c.b16 %v522, %v521
      %v636 = vpack.c.b16 %v524, %v523
      %v637 = vpack.c.b16 %v526, %v525
      %v638 = vpack.c.b16 %v528, %v527
      %v639 = vpack.c.b16 %v530, %v529
      %v640 = vpack.c.b16 %v532, %v531
      %v641 = vpack.c.b16 %v534, %v533
      %v642 = vpack.c.b16 %v536, %v535
      %v643 = vpack.c.b16 %v538, %v537
      %v644 = vpack.c.b16 %v540, %v539
      %v645 = vpack.c.b16 %v542, %v541
      %v646 = vpack.c.b16 %v544, %v543
      %v647 = vpack.c.b16 %v546, %v545
      %v648 = vpack.c.b16 %v548, %v547
      %v649 = vpack.c.b16 %v550, %v549
      %v650 = vpack.c.b16 %v552, %v551
      %v651 = vpack.c.b16 %v554, %v553
      %v652 = vpack.c.b16 %v556, %v555
      %v653 = vpack.c.b16 %v558, %v557
      %v654 = vpack.c.b16 %v560, %v559
      %v655 = vpack.c.b16 %v562, %v561
      %v656 = vpack.c.b16 %v564, %v563
      %v657 = vpack.c.b16 %v566, %v565
      %v658 = vpack.c.b16 %v568, %v567
      %v659 = vpack.c.b16 %v570, %v569
      %v660 = vpack.c.b16 %v572, %v571
      %v661 = vpack.c.b16 %v574, %v573
      %v662 = vpack.c.b16 %v576, %v575
      %v663 = vpack.c.b16 %v578, %v577
      %v664 = vpack.c.b16 %v580, %v579
      %v665 = vpack.c.b16 %v582, %v581
      %v666 = vpack.c.b16 %v584, %v583
      %v667 = vpack.c.b16 %v586, %v585
      %v668 = vpack.c.b16 %v588, %v587
      %v669 = vpack.c.b16 %v590, %v589
      %v670 = vpack.c.b16 %v592, %v591
      %v671 = vpack.c.b16 %v594, %v593
      %v672 = vpack.c.b16 %v596, %v595
      %v673 = vpack.c.b16 %v598, %v597
      %v674 = vpack.c.b16 %v600, %v599
      %v675 = vpack.c.b16 %v602, %v601
      %v676 = vpack.c.b16 %v604, %v603
      %v677 = vpack.c.b16 %v606, %v605
      %v678 = vpack.c.b16 %v608, %v607
      %v679 = vpack.c.b16 %v610, %v609
      %v680 = vpack.c.b16 %v612, %v611
      %v681 = vpack.c.b16 %v614, %v613
      %v682 = vpack.c.b16 %v616, %v615
      %v683 = vpack.c.b16 %v618, %v617
      %v684 = vpack.c.b16 %v620, %v619
      %vm685 = vcmask 64512
      %v687 = vsel %vm685, %v621, 0
      %v690 = vsel %vm685, %v622, 0
      %v693 = vsel %vm685, %v623, 0
      %v696 = vsel %vm685, %v624, 0
      %v699 = vsel %vm685, %v625, 0
      %v702 = vsel %vm685, %v626, 0
      %v705 = vsel %vm685, %v627, 0
      %v708 = vsel %vm685, %v628, 0
      %v711 = vsel %vm685, %v629, 0
      %v714 = vsel %vm685, %v630, 0
      %v717 = vsel %vm685, %v631, 0
      %v720 = vsel %vm685, %v632, 0
      %v723 = vsel %vm685, %v633, 0
      %v726 = vsel %vm685, %v634, 0
      %v729 = vsel %vm685, %v635, 0
      %v732 = vsel %vm685, %v636, 0
      %v735 = vsel %vm685, %v637, 0
      %v738 = vsel %vm685, %v638, 0
      %v741 = vsel %vm685, %v639, 0
      %v744 = vsel %vm685, %v640, 0
      %v747 = vsel %vm685, %v641, 0
      %v750 = vsel %vm685, %v642, 0
      %v753 = vsel %vm685, %v643, 0
      %v756 = vsel %vm685, %v644, 0
      %v759 = vsel %vm685, %v645, 0
      %v762 = vsel %vm685, %v646, 0
      %v765 = vsel %vm685, %v647, 0
      %v768 = vsel %vm685, %v648, 0
      %v771 = vsel %vm685, %v649, 0
      %v774 = vsel %vm685, %v650, 0
      %v777 = vsel %vm685, %v651, 0
      %v780 = vsel %vm685, %v652, 0
      %v783 = vsel %vm685, %v653, 0
      %v786 = vsel %vm685, %v654, 0
      %v789 = vsel %vm685, %v655, 0
      %v792 = vsel %vm685, %v656, 0
      %v795 = vsel %vm685, %v657, 0
      %v798 = vsel %vm685, %v658, 0
      %v801 = vsel %vm685, %v659, 0
      %v804 = vsel %vm685, %v660, 0
      %v807 = vsel %vm685, %v661, 0
      %v810 = vsel %vm685, %v662, 0
      %v813 = vsel %vm685, %v663, 0
      %v816 = vsel %vm685, %v664, 0
      %v819 = vsel %vm685, %v665, 0
      %v822 = vsel %vm685, %v666, 0
      %v825 = vsel %vm685, %v667, 0
      %v828 = vsel %vm685, %v668, 0
      %v831 = vsel %vm685, %v669, 0
      %v834 = vsel %vm685, %v670, 0
      %v837 = vsel %vm685, %v671, 0
      %v840 = vsel %vm685, %v672, 0
      %v843 = vsel %vm685, %v673, 0
      %v846 = vsel %vm685, %v674, 0
      %v849 = vsel %vm685, %v675, 0
      %v852 = vsel %vm685, %v676, 0
      %v855 = vsel %vm685, %v677, 0
      %v858 = vsel %vm685, %v678, 0
      %v861 = vsel %vm685, %v679, 0
      %v864 = vsel %vm685, %v680, 0
      %v867 = vsel %vm685, %v681, 0
      %v870 = vsel %vm685, %v682, 0
      %v873 = vsel %vm685, %v683, 0
      %v876 = vsel %vm685, %v684, 0
      %vm878 = vcmask 1043456
      %v880 = vsel %vm878, %v357, 0
      %882 = vmatprep.subr.bf16.mxu0 0
      %883 = vmatpush1.bf16.msra.mxu0 %v880
      %884 = vmatprep.subr.bf16.mxu0 0
      %885 = vmatpush1.bf16.msra.mxu0 0
      %886 = vmatprep.subr.bf16.mxu0 0
      %887 = vmatpush1.bf16.msra.mxu0 0
      %888 = vmatprep.subr.bf16.mxu0 0
      %889 = vmatpush1.bf16.msra.mxu0 0
      %890 = vmatprep.subr.bf16.mxu0 0
      %891 = vmatpush1.bf16.msra.mxu0 0
      %892 = vmatprep.subr.bf16.mxu0 0
      %893 = vmatpush1.bf16.msra.mxu0 0
      %894 = vmatprep.subr.bf16.mxu0 0
      %895 = vmatpush1.bf16.msra.mxu0 0
      %896 = vmatprep.subr.bf16.mxu0 0
      %897 = vmatpush1.bf16.msra.mxu0 0
      %898 = vmatprep.subr.bf16.mxu0 0
      %899 = vmatpush1.bf16.msra.mxu0 0
      %900 = vmatprep.subr.bf16.mxu0 0
      %901 = vmatpush1.bf16.msra.mxu0 0
      %902 = vmatprep.subr.bf16.mxu0 0
      %903 = vmatpush1.bf16.msra.mxu0 0
      %904 = vmatprep.subr.bf16.mxu0 0
      %905 = vmatpush1.bf16.msra.mxu0 0
      %906 = vmatprep.subr.bf16.mxu0 0
      %907 = vmatpush1.bf16.msra.mxu0 0
      %908 = vmatprep.subr.bf16.mxu0 0
      %909 = vmatpush1.bf16.msra.mxu0 0
      %910 = vmatprep.subr.bf16.mxu0 0
      %911 = vmatpush1.bf16.msra.mxu0 0
      %912 = vmatprep.subr.bf16.mxu0 0
      %913 = vmatpush1.bf16.msra.mxu0 0
      %914 = vmatprep.mubr.bf16.mxu0 0
      %915 = vmatmul.mubr.bf16.gmra.mrb[0].mxu0 %v687
      %v916 = vpop.f32.mrb[0].mxu0
      %v917 = vadd.f32 %v363, %v916
      %v918 = vpop.f32.mrb[0].mxu0
      %v919 = vpop.f32.mrb[0].mxu0
      %v920 = vadd.f32 %v363, %v919
      %v921 = vpop.f32.mrb[0].mxu0
      %922 = vmatprep.mubr.bf16.mxu0 0
      %923 = vmatmul.mubr.bf16.gmra.mrb[0].mxu0 %v690
      %v924 = vpop.f32.mrb[0].mxu0
      %v925 = vadd.f32 %v363, %v924
      %v926 = vpop.f32.mrb[0].mxu0
      %v927 = vpop.f32.mrb[0].mxu0
      %v928 = vadd.f32 %v363, %v927
      %v929 = vpop.f32.mrb[0].mxu0
      %930 = vmatprep.mubr.bf16.mxu0 0
      %931 = vmatmul.mubr.bf16.gmra.mrb[0].mxu0 %v693
      %v932 = vpop.f32.mrb[0].mxu0
      %v933 = vadd.f32 %v363, %v932
      %v934 = vpop.f32.mrb[0].mxu0
      %v935 = vpop.f32.mrb[0].mxu0
      %v936 = vadd.f32 %v363, %v935
      %v937 = vpop.f32.mrb[0].mxu0
      %938 = vmatprep.mubr.bf16.mxu0 0
      %939 = vmatmul.mubr.bf16.gmra.mrb[0].mxu0 %v696
      %v940 = vpop.f32.mrb[0].mxu0
      %v941 = vadd.f32 %v363, %v940
      %v942 = vpop.f32.mrb[0].mxu0
      %v943 = vpop.f32.mrb[0].mxu0
      %v944 = vadd.f32 %v363, %v943
      %v945 = vpop.f32.mrb[0].mxu0
      %946 = vmatprep.mubr.bf16.mxu0 0
      %947 = vmatmul.mubr.bf16.gmra.mrb[0].mxu0 %v699
      %v948 = vpop.f32.mrb[0].mxu0
      %v949 = vadd.f32 %v363, %v948
      %v950 = vpop.f32.mrb[0].mxu0
      %v951 = vpop.f32.mrb[0].mxu0
      %v952 = vadd.f32 %v363, %v951
      %v953 = vpop.f32.mrb[0].mxu0
      %954 = vmatprep.mubr.bf16.mxu0 0
      %955 = vmatmul.mubr.bf16.gmra.mrb[0].mxu0 %v702
      %v956 = vpop.f32.mrb[0].mxu0
      %v957 = vadd.f32 %v363, %v956
      %v958 = vpop.f32.mrb[0].mxu0
      %v959 = vpop.f32.mrb[0].mxu0
      %v960 = vadd.f32 %v363, %v959
      %v961 = vpop.f32.mrb[0].mxu0
      %962 = vmatprep.mubr.bf16.mxu0 0
      %963 = vmatmul.mubr.bf16.gmra.mrb[0].mxu0 %v705
      %v964 = vpop.f32.mrb[0].mxu0
      %v965 = vadd.f32 %v363, %v964
      %v966 = vpop.f32.mrb[0].mxu0
      %v967 = vpop.f32.mrb[0].mxu0
      %v968 = vadd.f32 %v363, %v967
      %v969 = vpop.f32.mrb[0].mxu0
      %970 = vmatprep.mubr.bf16.mxu0 0
      %971 = vmatmul.mubr.bf16.gmra.mrb[0].mxu0 %v708
      %v972 = vpop.f32.mrb[0].mxu0
      %v973 = vadd.f32 %v363, %v972
      %v974 = vpop.f32.mrb[0].mxu0
      %v975 = vpop.f32.mrb[0].mxu0
      %v976 = vadd.f32 %v363, %v975
      %v977 = vpop.f32.mrb[0].mxu0
      %978 = vmatprep.mubr.bf16.mxu0 0
      %979 = vmatmul.mubr.bf16.gmra.mrb[0].mxu0 %v711
      %v980 = vpop.f32.mrb[0].mxu0
      %v981 = vadd.f32 %v363, %v980
      %v982 = vpop.f32.mrb[0].mxu0
      %v983 = vpop.f32.mrb[0].mxu0
      %v984 = vadd.f32 %v363, %v983
      %v985 = vpop.f32.mrb[0].mxu0
      %986 = vmatprep.mubr.bf16.mxu0 0
      %987 = vmatmul.mubr.bf16.gmra.mrb[0].mxu0 %v714
      %v988 = vpop.f32.mrb[0].mxu0
      %v989 = vadd.f32 %v363, %v988
      %v990 = vpop.f32.mrb[0].mxu0
      %v991 = vpop.f32.mrb[0].mxu0
      %v992 = vadd.f32 %v363, %v991
      %v993 = vpop.f32.mrb[0].mxu0
      %994 = vmatprep.mubr.bf16.mxu0 0
      %995 = vmatmul.mubr.bf16.gmra.mrb[0].mxu0 %v717
      %v996 = vpop.f32.mrb[0].mxu0
      %v997 = vadd.f32 %v363, %v996
      %v998 = vpop.f32.mrb[0].mxu0
      %v999 = vpop.f32.mrb[0].mxu0
      %v1000 = vadd.f32 %v363, %v999
      %v1001 = vpop.f32.mrb[0].mxu0
      %1002 = vmatprep.mubr.bf16.mxu0 0
      %1003 = vmatmul.mubr.bf16.gmra.mrb[0].mxu0 %v720
      %v1004 = vpop.f32.mrb[0].mxu0
      %v1005 = vadd.f32 %v363, %v1004
      %v1006 = vpop.f32.mrb[0].mxu0
      %v1007 = vpop.f32.mrb[0].mxu0
      %v1008 = vadd.f32 %v363, %v1007
      %v1009 = vpop.f32.mrb[0].mxu0
      %1010 = vmatprep.mubr.bf16.mxu0 0
      %1011 = vmatmul.mubr.bf16.gmra.mrb[0].mxu0 %v723
      %v1012 = vpop.f32.mrb[0].mxu0
      %v1013 = vadd.f32 %v363, %v1012
      %v1014 = vpop.f32.mrb[0].mxu0
      %v1015 = vpop.f32.mrb[0].mxu0
      %v1016 = vadd.f32 %v363, %v1015
      %v1017 = vpop.f32.mrb[0].mxu0
      %1018 = vmatprep.mubr.bf16.mxu0 0
      %1019 = vmatmul.mubr.bf16.gmra.mrb[0].mxu0 %v726
      %v1020 = vpop.f32.mrb[0].mxu0
      %v1021 = vadd.f32 %v363, %v1020
      %v1022 = vpop.f32.mrb[0].mxu0
      %v1023 = vpop.f32.mrb[0].mxu0
      %v1024 = vadd.f32 %v363, %v1023
      %v1025 = vpop.f32.mrb[0].mxu0
      %1026 = vmatprep.mubr.bf16.mxu0 0
      %1027 = vmatmul.mubr.bf16.gmra.mrb[0].mxu0 %v729
      %v1028 = vpop.f32.mrb[0].mxu0
      %v1029 = vadd.f32 %v363, %v1028
      %v1030 = vpop.f32.mrb[0].mxu0
      %v1031 = vpop.f32.mrb[0].mxu0
      %v1032 = vadd.f32 %v363, %v1031
      %v1033 = vpop.f32.mrb[0].mxu0
      %1034 = vmatprep.mubr.bf16.mxu0 0
      %1035 = vmatmul.mubr.bf16.gmra.mrb[0].mxu0 %v732
      %v1036 = vpop.f32.mrb[0].mxu0
      %v1037 = vadd.f32 %v363, %v1036
      %v1038 = vpop.f32.mrb[0].mxu0
      %v1039 = vpop.f32.mrb[0].mxu0
      %v1040 = vadd.f32 %v363, %v1039
      %v1041 = vpop.f32.mrb[0].mxu0
      %1042 = vmatprep.mubr.bf16.mxu0 0
      %1043 = vmatmul.mubr.bf16.gmra.mrb[0].mxu0 %v735
      %v1044 = vpop.f32.mrb[0].mxu0
      %v1045 = vadd.f32 %v363, %v1044
      %v1046 = vpop.f32.mrb[0].mxu0
      %v1047 = vpop.f32.mrb[0].mxu0
      %v1048 = vadd.f32 %v363, %v1047
      %v1049 = vpop.f32.mrb[0].mxu0
      %1050 = vmatprep.mubr.bf16.mxu0 0
      %1051 = vmatmul.mubr.bf16.gmra.mrb[0].mxu0 %v738
      %v1052 = vpop.f32.mrb[0].mxu0
      %v1053 = vadd.f32 %v363, %v1052
      %v1054 = vpop.f32.mrb[0].mxu0
      %v1055 = vpop.f32.mrb[0].mxu0
      %v1056 = vadd.f32 %v363, %v1055
      %v1057 = vpop.f32.mrb[0].mxu0
      %1058 = vmatprep.mubr.bf16.mxu0 0
      %1059 = vmatmul.mubr.bf16.gmra.mrb[0].mxu0 %v741
      %v1060 = vpop.f32.mrb[0].mxu0
      %v1061 = vadd.f32 %v363, %v1060
      %v1062 = vpop.f32.mrb[0].mxu0
      %v1063 = vpop.f32.mrb[0].mxu0
      %v1064 = vadd.f32 %v363, %v1063
      %v1065 = vpop.f32.mrb[0].mxu0
      %1066 = vmatprep.mubr.bf16.mxu0 0
      %1067 = vmatmul.mubr.bf16.gmra.mrb[0].mxu0 %v744
      %v1068 = vpop.f32.mrb[0].mxu0
      %v1069 = vadd.f32 %v363, %v1068
      %v1070 = vpop.f32.mrb[0].mxu0
      %v1071 = vpop.f32.mrb[0].mxu0
      %v1072 = vadd.f32 %v363, %v1071
      %v1073 = vpop.f32.mrb[0].mxu0
      %1074 = vmatprep.mubr.bf16.mxu0 0
      %1075 = vmatmul.mubr.bf16.gmra.mrb[0].mxu0 %v747
      %v1076 = vpop.f32.mrb[0].mxu0
      %v1077 = vadd.f32 %v363, %v1076
      %v1078 = vpop.f32.mrb[0].mxu0
      %v1079 = vpop.f32.mrb[0].mxu0
      %v1080 = vadd.f32 %v363, %v1079
      %v1081 = vpop.f32.mrb[0].mxu0
      %1082 = vmatprep.mubr.bf16.mxu0 0
      %1083 = vmatmul.mubr.bf16.gmra.mrb[0].mxu0 %v750
      %v1084 = vpop.f32.mrb[0].mxu0
      %v1085 = vadd.f32 %v363, %v1084
      %v1086 = vpop.f32.mrb[0].mxu0
      %v1087 = vpop.f32.mrb[0].mxu0
      %v1088 = vadd.f32 %v363, %v1087
      %v1089 = vpop.f32.mrb[0].mxu0
      %1090 = vmatprep.mubr.bf16.mxu0 0
      %1091 = vmatmul.mubr.bf16.gmra.mrb[0].mxu0 %v753
      %v1092 = vpop.f32.mrb[0].mxu0
      %v1093 = vadd.f32 %v363, %v1092
      %v1094 = vpop.f32.mrb[0].mxu0
      %v1095 = vpop.f32.mrb[0].mxu0
      %v1096 = vadd.f32 %v363, %v1095
      %v1097 = vpop.f32.mrb[0].mxu0
      %1098 = vmatprep.mubr.bf16.mxu0 0
      %1099 = vmatmul.mubr.bf16.gmra.mrb[0].mxu0 %v756
      %v1100 = vpop.f32.mrb[0].mxu0
      %v1101 = vadd.f32 %v363, %v1100
      %v1102 = vpop.f32.mrb[0].mxu0
      %v1103 = vpop.f32.mrb[0].mxu0
      %v1104 = vadd.f32 %v363, %v1103
      %v1105 = vpop.f32.mrb[0].mxu0
      %1106 = vmatprep.mubr.bf16.mxu0 0
      %1107 = vmatmul.mubr.bf16.gmra.mrb[0].mxu0 %v759
      %v1108 = vpop.f32.mrb[0].mxu0
      %v1109 = vadd.f32 %v363, %v1108
      %v1110 = vpop.f32.mrb[0].mxu0
      %v1111 = vpop.f32.mrb[0].mxu0
      %v1112 = vadd.f32 %v363, %v1111
      %v1113 = vpop.f32.mrb[0].mxu0
      %1114 = vmatprep.mubr.bf16.mxu0 0
      %1115 = vmatmul.mubr.bf16.gmra.mrb[0].mxu0 %v762
      %v1116 = vpop.f32.mrb[0].mxu0
      %v1117 = vadd.f32 %v363, %v1116
      %v1118 = vpop.f32.mrb[0].mxu0
      %v1119 = vpop.f32.mrb[0].mxu0
      %v1120 = vadd.f32 %v363, %v1119
      %v1121 = vpop.f32.mrb[0].mxu0
      %1122 = vmatprep.mubr.bf16.mxu0 0
      %1123 = vmatmul.mubr.bf16.gmra.mrb[0].mxu0 %v765
      %v1124 = vpop.f32.mrb[0].mxu0
      %v1125 = vadd.f32 %v363, %v1124
      %v1126 = vpop.f32.mrb[0].mxu0
      %v1127 = vpop.f32.mrb[0].mxu0
      %v1128 = vadd.f32 %v363, %v1127
      %v1129 = vpop.f32.mrb[0].mxu0
      %1130 = vmatprep.mubr.bf16.mxu0 0
      %1131 = vmatmul.mubr.bf16.gmra.mrb[0].mxu0 %v768
      %v1132 = vpop.f32.mrb[0].mxu0
      %v1133 = vadd.f32 %v363, %v1132
      %v1134 = vpop.f32.mrb[0].mxu0
      %v1135 = vpop.f32.mrb[0].mxu0
      %v1136 = vadd.f32 %v363, %v1135
      %v1137 = vpop.f32.mrb[0].mxu0
      %1138 = vmatprep.mubr.bf16.mxu0 0
      %1139 = vmatmul.mubr.bf16.gmra.mrb[0].mxu0 %v771
      %v1140 = vpop.f32.mrb[0].mxu0
      %v1141 = vadd.f32 %v363, %v1140
      %v1142 = vpop.f32.mrb[0].mxu0
      %v1143 = vpop.f32.mrb[0].mxu0
      %v1144 = vadd.f32 %v363, %v1143
      %v1145 = vpop.f32.mrb[0].mxu0
      %1146 = vmatprep.mubr.bf16.mxu0 0
      %1147 = vmatmul.mubr.bf16.gmra.mrb[0].mxu0 %v774
      %v1148 = vpop.f32.mrb[0].mxu0
      %v1149 = vadd.f32 %v363, %v1148
      %v1150 = vpop.f32.mrb[0].mxu0
      %v1151 = vpop.f32.mrb[0].mxu0
      %v1152 = vadd.f32 %v363, %v1151
      %v1153 = vpop.f32.mrb[0].mxu0
      %1154 = vmatprep.mubr.bf16.mxu0 0
      %1155 = vmatmul.mubr.bf16.gmra.mrb[0].mxu0 %v777
      %v1156 = vpop.f32.mrb[0].mxu0
      %v1157 = vadd.f32 %v363, %v1156
      %v1158 = vpop.f32.mrb[0].mxu0
      %v1159 = vpop.f32.mrb[0].mxu0
      %v1160 = vadd.f32 %v363, %v1159
      %v1161 = vpop.f32.mrb[0].mxu0
      %1162 = vmatprep.mubr.bf16.mxu0 0
      %1163 = vmatmul.mubr.bf16.gmra.mrb[0].mxu0 %v780
      %v1164 = vpop.f32.mrb[0].mxu0
      %v1165 = vadd.f32 %v363, %v1164
      %v1166 = vpop.f32.mrb[0].mxu0
      %v1167 = vpop.f32.mrb[0].mxu0
      %v1168 = vadd.f32 %v363, %v1167
      %v1169 = vpop.f32.mrb[0].mxu0
      %1170 = vmatprep.mubr.bf16.mxu0 0
      %1171 = vmatmul.mubr.bf16.gmra.mrb[0].mxu0 %v783
      %v1172 = vpop.f32.mrb[0].mxu0
      %v1173 = vadd.f32 %v363, %v1172
      %v1174 = vpop.f32.mrb[0].mxu0
      %v1175 = vpop.f32.mrb[0].mxu0
      %v1176 = vadd.f32 %v363, %v1175
      %v1177 = vpop.f32.mrb[0].mxu0
      %1178 = vmatprep.mubr.bf16.mxu0 0
      %1179 = vmatmul.mubr.bf16.gmra.mrb[0].mxu0 %v786
      %v1180 = vpop.f32.mrb[0].mxu0
      %v1181 = vadd.f32 %v363, %v1180
      %v1182 = vpop.f32.mrb[0].mxu0
      %v1183 = vpop.f32.mrb[0].mxu0
      %v1184 = vadd.f32 %v363, %v1183
      %v1185 = vpop.f32.mrb[0].mxu0
      %1186 = vmatprep.mubr.bf16.mxu0 0
      %1187 = vmatmul.mubr.bf16.gmra.mrb[0].mxu0 %v789
      %v1188 = vpop.f32.mrb[0].mxu0
      %v1189 = vadd.f32 %v363, %v1188
      %v1190 = vpop.f32.mrb[0].mxu0
      %v1191 = vpop.f32.mrb[0].mxu0
      %v1192 = vadd.f32 %v363, %v1191
      %v1193 = vpop.f32.mrb[0].mxu0
      %1194 = vmatprep.mubr.bf16.mxu0 0
      %1195 = vmatmul.mubr.bf16.gmra.mrb[0].mxu0 %v792
      %v1196 = vpop.f32.mrb[0].mxu0
      %v1197 = vadd.f32 %v363, %v1196
      %v1198 = vpop.f32.mrb[0].mxu0
      %v1199 = vpop.f32.mrb[0].mxu0
      %v1200 = vadd.f32 %v363, %v1199
      %v1201 = vpop.f32.mrb[0].mxu0
      %1202 = vmatprep.mubr.bf16.mxu0 0
      %1203 = vmatmul.mubr.bf16.gmra.mrb[0].mxu0 %v795
      %v1204 = vpop.f32.mrb[0].mxu0
      %v1205 = vadd.f32 %v363, %v1204
      %v1206 = vpop.f32.mrb[0].mxu0
      %v1207 = vpop.f32.mrb[0].mxu0
      %v1208 = vadd.f32 %v363, %v1207
      %v1209 = vpop.f32.mrb[0].mxu0
      %1210 = vmatprep.mubr.bf16.mxu0 0
      %1211 = vmatmul.mubr.bf16.gmra.mrb[0].mxu0 %v798
      %v1212 = vpop.f32.mrb[0].mxu0
      %v1213 = vadd.f32 %v363, %v1212
      %v1214 = vpop.f32.mrb[0].mxu0
      %v1215 = vpop.f32.mrb[0].mxu0
      %v1216 = vadd.f32 %v363, %v1215
      %v1217 = vpop.f32.mrb[0].mxu0
      %1218 = vmatprep.mubr.bf16.mxu0 0
      %1219 = vmatmul.mubr.bf16.gmra.mrb[0].mxu0 %v801
      %v1220 = vpop.f32.mrb[0].mxu0
      %v1221 = vadd.f32 %v363, %v1220
      %v1222 = vpop.f32.mrb[0].mxu0
      %v1223 = vpop.f32.mrb[0].mxu0
      %v1224 = vadd.f32 %v363, %v1223
      %v1225 = vpop.f32.mrb[0].mxu0
      %1226 = vmatprep.mubr.bf16.mxu0 0
      %1227 = vmatmul.mubr.bf16.gmra.mrb[0].mxu0 %v804
      %v1228 = vpop.f32.mrb[0].mxu0
      %v1229 = vadd.f32 %v363, %v1228
      %v1230 = vpop.f32.mrb[0].mxu0
      %v1231 = vpop.f32.mrb[0].mxu0
      %v1232 = vadd.f32 %v363, %v1231
      %v1233 = vpop.f32.mrb[0].mxu0
      %1234 = vmatprep.mubr.bf16.mxu0 0
      %1235 = vmatmul.mubr.bf16.gmra.mrb[0].mxu0 %v807
      %v1236 = vpop.f32.mrb[0].mxu0
      %v1237 = vadd.f32 %v363, %v1236
      %v1238 = vpop.f32.mrb[0].mxu0
      %v1239 = vpop.f32.mrb[0].mxu0
      %v1240 = vadd.f32 %v363, %v1239
      %v1241 = vpop.f32.mrb[0].mxu0
      %1242 = vmatprep.mubr.bf16.mxu0 0
      %1243 = vmatmul.mubr.bf16.gmra.mrb[0].mxu0 %v810
      %v1244 = vpop.f32.mrb[0].mxu0
      %v1245 = vadd.f32 %v363, %v1244
      %v1246 = vpop.f32.mrb[0].mxu0
      %v1247 = vpop.f32.mrb[0].mxu0
      %v1248 = vadd.f32 %v363, %v1247
      %v1249 = vpop.f32.mrb[0].mxu0
      %1250 = vmatprep.mubr.bf16.mxu0 0
      %1251 = vmatmul.mubr.bf16.gmra.mrb[0].mxu0 %v813
      %v1252 = vpop.f32.mrb[0].mxu0
      %v1253 = vadd.f32 %v363, %v1252
      %v1254 = vpop.f32.mrb[0].mxu0
      %v1255 = vpop.f32.mrb[0].mxu0
      %v1256 = vadd.f32 %v363, %v1255
      %v1257 = vpop.f32.mrb[0].mxu0
      %1258 = vmatprep.mubr.bf16.mxu0 0
      %1259 = vmatmul.mubr.bf16.gmra.mrb[0].mxu0 %v816
      %v1260 = vpop.f32.mrb[0].mxu0
      %v1261 = vadd.f32 %v363, %v1260
      %v1262 = vpop.f32.mrb[0].mxu0
      %v1263 = vpop.f32.mrb[0].mxu0
      %v1264 = vadd.f32 %v363, %v1263
      %v1265 = vpop.f32.mrb[0].mxu0
      %1266 = vmatprep.mubr.bf16.mxu0 0
      %1267 = vmatmul.mubr.bf16.gmra.mrb[0].mxu0 %v819
      %v1268 = vpop.f32.mrb[0].mxu0
      %v1269 = vadd.f32 %v363, %v1268
      %v1270 = vpop.f32.mrb[0].mxu0
      %v1271 = vpop.f32.mrb[0].mxu0
      %v1272 = vadd.f32 %v363, %v1271
      %v1273 = vpop.f32.mrb[0].mxu0
      %1274 = vmatprep.mubr.bf16.mxu0 0
      %1275 = vmatmul.mubr.bf16.gmra.mrb[0].mxu0 %v822
      %v1276 = vpop.f32.mrb[0].mxu0
      %v1277 = vadd.f32 %v363, %v1276
      %v1278 = vpop.f32.mrb[0].mxu0
      %v1279 = vpop.f32.mrb[0].mxu0
      %v1280 = vadd.f32 %v363, %v1279
      %v1281 = vpop.f32.mrb[0].mxu0
      %1282 = vmatprep.mubr.bf16.mxu0 0
      %1283 = vmatmul.mubr.bf16.gmra.mrb[0].mxu0 %v825
      %v1284 = vpop.f32.mrb[0].mxu0
      %v1285 = vadd.f32 %v363, %v1284
      %v1286 = vpop.f32.mrb[0].mxu0
      %v1287 = vpop.f32.mrb[0].mxu0
      %v1288 = vadd.f32 %v363, %v1287
      %v1289 = vpop.f32.mrb[0].mxu0
      %1290 = vmatprep.mubr.bf16.mxu0 0
      %1291 = vmatmul.mubr.bf16.gmra.mrb[0].mxu0 %v828
      %v1292 = vpop.f32.mrb[0].mxu0
      %v1293 = vadd.f32 %v363, %v1292
      %v1294 = vpop.f32.mrb[0].mxu0
      %v1295 = vpop.f32.mrb[0].mxu0
      %v1296 = vadd.f32 %v363, %v1295
      %v1297 = vpop.f32.mrb[0].mxu0
      %1298 = vmatprep.mubr.bf16.mxu0 0
      %1299 = vmatmul.mubr.bf16.gmra.mrb[0].mxu0 %v831
      %v1300 = vpop.f32.mrb[0].mxu0
      %v1301 = vadd.f32 %v363, %v1300
      %v1302 = vpop.f32.mrb[0].mxu0
      %v1303 = vpop.f32.mrb[0].mxu0
      %v1304 = vadd.f32 %v363, %v1303
      %v1305 = vpop.f32.mrb[0].mxu0
      %1306 = vmatprep.mubr.bf16.mxu0 0
      %1307 = vmatmul.mubr.bf16.gmra.mrb[0].mxu0 %v834
      %v1308 = vpop.f32.mrb[0].mxu0
      %v1309 = vadd.f32 %v363, %v1308
      %v1310 = vpop.f32.mrb[0].mxu0
      %v1311 = vpop.f32.mrb[0].mxu0
      %v1312 = vadd.f32 %v363, %v1311
      %v1313 = vpop.f32.mrb[0].mxu0
      %1314 = vmatprep.mubr.bf16.mxu0 0
      %1315 = vmatmul.mubr.bf16.gmra.mrb[0].mxu0 %v837
      %v1316 = vpop.f32.mrb[0].mxu0
      %v1317 = vadd.f32 %v363, %v1316
      %v1318 = vpop.f32.mrb[0].mxu0
      %v1319 = vpop.f32.mrb[0].mxu0
      %v1320 = vadd.f32 %v363, %v1319
      %v1321 = vpop.f32.mrb[0].mxu0
      %1322 = vmatprep.mubr.bf16.mxu0 0
      %1323 = vmatmul.mubr.bf16.gmra.mrb[0].mxu0 %v840
      %v1324 = vpop.f32.mrb[0].mxu0
      %v1325 = vadd.f32 %v363, %v1324
      %v1326 = vpop.f32.mrb[0].mxu0
      %v1327 = vpop.f32.mrb[0].mxu0
      %v1328 = vadd.f32 %v363, %v1327
      %v1329 = vpop.f32.mrb[0].mxu0
      %1330 = vmatprep.mubr.bf16.mxu0 0
      %1331 = vmatmul.mubr.bf16.gmra.mrb[0].mxu0 %v843
      %v1332 = vpop.f32.mrb[0].mxu0
      %v1333 = vadd.f32 %v363, %v1332
      %v1334 = vpop.f32.mrb[0].mxu0
      %v1335 = vpop.f32.mrb[0].mxu0
      %v1336 = vadd.f32 %v363, %v1335
      %v1337 = vpop.f32.mrb[0].mxu0
      %1338 = vmatprep.mubr.bf16.mxu0 0
      %1339 = vmatmul.mubr.bf16.gmra.mrb[0].mxu0 %v846
      %v1340 = vpop.f32.mrb[0].mxu0
      %v1341 = vadd.f32 %v363, %v1340
      %v1342 = vpop.f32.mrb[0].mxu0
      %v1343 = vpop.f32.mrb[0].mxu0
      %v1344 = vadd.f32 %v363, %v1343
      %v1345 = vpop.f32.mrb[0].mxu0
      %1346 = vmatprep.mubr.bf16.mxu0 0
      %1347 = vmatmul.mubr.bf16.gmra.mrb[0].mxu0 %v849
      %v1348 = vpop.f32.mrb[0].mxu0
      %v1349 = vadd.f32 %v363, %v1348
      %v1350 = vpop.f32.mrb[0].mxu0
      %v1351 = vpop.f32.mrb[0].mxu0
      %v1352 = vadd.f32 %v363, %v1351
      %v1353 = vpop.f32.mrb[0].mxu0
      %1354 = vmatprep.mubr.bf16.mxu0 0
      %1355 = vmatmul.mubr.bf16.gmra.mrb[0].mxu0 %v852
      %v1356 = vpop.f32.mrb[0].mxu0
      %v1357 = vadd.f32 %v363, %v1356
      %v1358 = vpop.f32.mrb[0].mxu0
      %v1359 = vpop.f32.mrb[0].mxu0
      %v1360 = vadd.f32 %v363, %v1359
      %v1361 = vpop.f32.mrb[0].mxu0
      %1362 = vmatprep.mubr.bf16.mxu0 0
      %1363 = vmatmul.mubr.bf16.gmra.mrb[0].mxu0 %v855
      %v1364 = vpop.f32.mrb[0].mxu0
      %v1365 = vadd.f32 %v363, %v1364
      %v1366 = vpop.f32.mrb[0].mxu0
      %v1367 = vpop.f32.mrb[0].mxu0
      %v1368 = vadd.f32 %v363, %v1367
      %v1369 = vpop.f32.mrb[0].mxu0
      %1370 = vmatprep.mubr.bf16.mxu0 0
      %1371 = vmatmul.mubr.bf16.gmra.mrb[0].mxu0 %v858
      %v1372 = vpop.f32.mrb[0].mxu0
      %v1373 = vadd.f32 %v363, %v1372
      %v1374 = vpop.f32.mrb[0].mxu0
      %v1375 = vpop.f32.mrb[0].mxu0
      %v1376 = vadd.f32 %v363, %v1375
      %v1377 = vpop.f32.mrb[0].mxu0
      %1378 = vmatprep.mubr.bf16.mxu0 0
      %1379 = vmatmul.mubr.bf16.gmra.mrb[0].mxu0 %v861
      %v1380 = vpop.f32.mrb[0].mxu0
      %v1381 = vadd.f32 %v363, %v1380
      %v1382 = vpop.f32.mrb[0].mxu0
      %v1383 = vpop.f32.mrb[0].mxu0
      %v1384 = vadd.f32 %v363, %v1383
      %v1385 = vpop.f32.mrb[0].mxu0
      %1386 = vmatprep.mubr.bf16.mxu0 0
      %1387 = vmatmul.mubr.bf16.gmra.mrb[0].mxu0 %v864
      %v1388 = vpop.f32.mrb[0].mxu0
      %v1389 = vadd.f32 %v363, %v1388
      %v1390 = vpop.f32.mrb[0].mxu0
      %v1391 = vpop.f32.mrb[0].mxu0
      %v1392 = vadd.f32 %v363, %v1391
      %v1393 = vpop.f32.mrb[0].mxu0
      %1394 = vmatprep.mubr.bf16.mxu0 0
      %1395 = vmatmul.mubr.bf16.gmra.mrb[0].mxu0 %v867
      %v1396 = vpop.f32.mrb[0].mxu0
      %v1397 = vadd.f32 %v363, %v1396
      %v1398 = vpop.f32.mrb[0].mxu0
      %v1399 = vpop.f32.mrb[0].mxu0
      %v1400 = vadd.f32 %v363, %v1399
      %v1401 = vpop.f32.mrb[0].mxu0
      %1402 = vmatprep.mubr.bf16.mxu0 0
      %1403 = vmatmul.mubr.bf16.gmra.mrb[0].mxu0 %v870
      %v1404 = vpop.f32.mrb[0].mxu0
      %v1405 = vadd.f32 %v363, %v1404
      %v1406 = vpop.f32.mrb[0].mxu0
      %v1407 = vpop.f32.mrb[0].mxu0
      %v1408 = vadd.f32 %v363, %v1407
      %v1409 = vpop.f32.mrb[0].mxu0
      %1410 = vmatprep.mubr.bf16.mxu0 0
      %1411 = vmatmul.mubr.bf16.gmra.mrb[0].mxu0 %v873
      %v1412 = vpop.f32.mrb[0].mxu0
      %v1413 = vadd.f32 %v363, %v1412
      %v1414 = vpop.f32.mrb[0].mxu0
      %v1415 = vpop.f32.mrb[0].mxu0
      %v1416 = vadd.f32 %v363, %v1415
      %v1417 = vpop.f32.mrb[0].mxu0
      %1418 = vmatprep.mubr.bf16.mxu0 0
      %1419 = vmatmul.mubr.bf16.gmra.mrb[0].mxu0 %v876
      %v1420 = vpop.f32.mrb[0].mxu0
      %v1421 = vadd.f32 %v363, %v1420
      %v1422 = vpop.f32.mrb[0].mxu0
      %v1423 = vpop.f32.mrb[0].mxu0
      %v1424 = vadd.f32 %v363, %v1423
      %v1425 = vpop.f32.mrb[0].mxu0
      %1426 = vdwg.mxu0
      %v1427 = vmax.f32 %v917, 0.0
      %v1428 = vmax.f32 %v920, 0.0
      %v1429 = vmax.f32 %v925, 0.0
      %v1430 = vmax.f32 %v928, 0.0
      %v1431 = vmax.f32 %v933, 0.0
      %v1432 = vmax.f32 %v936, 0.0
      %v1433 = vmax.f32 %v941, 0.0
      %v1434 = vmax.f32 %v944, 0.0
      %v1435 = vmax.f32 %v949, 0.0
      %v1436 = vmax.f32 %v952, 0.0
      %v1437 = vmax.f32 %v957, 0.0
      %v1438 = vmax.f32 %v960, 0.0
      %v1439 = vmax.f32 %v965, 0.0
      %v1440 = vmax.f32 %v968, 0.0
      %v1441 = vmax.f32 %v973, 0.0
      %v1442 = vmax.f32 %v976, 0.0
      %v1443 = vmax.f32 %v981, 0.0
      %v1444 = vmax.f32 %v984, 0.0
      %v1445 = vmax.f32 %v989, 0.0
      %v1446 = vmax.f32 %v992, 0.0
      %v1447 = vmax.f32 %v997, 0.0
      %v1448 = vmax.f32 %v1000, 0.0
      %v1449 = vmax.f32 %v1005, 0.0
      %v1450 = vmax.f32 %v1008, 0.0
      %v1451 = vmax.f32 %v1013, 0.0
      %v1452 = vmax.f32 %v1016, 0.0
      %v1453 = vmax.f32 %v1021, 0.0
      %v1454 = vmax.f32 %v1024, 0.0
      %v1455 = vmax.f32 %v1029, 0.0
      %v1456 = vmax.f32 %v1032, 0.0
      %v1457 = vmax.f32 %v1037, 0.0
      %v1458 = vmax.f32 %v1040, 0.0
      %v1459 = vmax.f32 %v1045, 0.0
      %v1460 = vmax.f32 %v1048, 0.0
      %v1461 = vmax.f32 %v1053, 0.0
      %v1462 = vmax.f32 %v1056, 0.0
      %v1463 = vmax.f32 %v1061, 0.0
      %v1464 = vmax.f32 %v1064, 0.0
      %v1465 = vmax.f32 %v1069, 0.0
      %v1466 = vmax.f32 %v1072, 0.0
      %v1467 = vmax.f32 %v1077, 0.0
      %v1468 = vmax.f32 %v1080, 0.0
      %v1469 = vmax.f32 %v1085, 0.0
      %v1470 = vmax.f32 %v1088, 0.0
      %v1471 = vmax.f32 %v1093, 0.0
      %v1472 = vmax.f32 %v1096, 0.0
      %v1473 = vmax.f32 %v1101, 0.0
      %v1474 = vmax.f32 %v1104, 0.0
      %v1475 = vmax.f32 %v1109, 0.0
      %v1476 = vmax.f32 %v1112, 0.0
      %v1477 = vmax.f32 %v1117, 0.0
      %v1478 = vmax.f32 %v1120, 0.0
      %v1479 = vmax.f32 %v1125, 0.0
      %v1480 = vmax.f32 %v1128, 0.0
      %v1481 = vmax.f32 %v1133, 0.0
      %v1482 = vmax.f32 %v1136, 0.0
      %v1483 = vmax.f32 %v1141, 0.0
      %v1484 = vmax.f32 %v1144, 0.0
      %v1485 = vmax.f32 %v1149, 0.0
      %v1486 = vmax.f32 %v1152, 0.0
      %v1487 = vmax.f32 %v1157, 0.0
      %v1488 = vmax.f32 %v1160, 0.0
      %v1489 = vmax.f32 %v1165, 0.0
      %v1490 = vmax.f32 %v1168, 0.0
      %v1491 = vmax.f32 %v1173, 0.0
      %v1492 = vmax.f32 %v1176, 0.0
      %v1493 = vmax.f32 %v1181, 0.0
      %v1494 = vmax.f32 %v1184, 0.0
      %v1495 = vmax.f32 %v1189, 0.0
      %v1496 = vmax.f32 %v1192, 0.0
      %v1497 = vmax.f32 %v1197, 0.0
      %v1498 = vmax.f32 %v1200, 0.0
      %v1499 = vmax.f32 %v1205, 0.0
      %v1500 = vmax.f32 %v1208, 0.0
      %v1501 = vmax.f32 %v1213, 0.0
      %v1502 = vmax.f32 %v1216, 0.0
      %v1503 = vmax.f32 %v1221, 0.0
      %v1504 = vmax.f32 %v1224, 0.0
      %v1505 = vmax.f32 %v1229, 0.0
      %v1506 = vmax.f32 %v1232, 0.0
      %v1507 = vmax.f32 %v1237, 0.0
      %v1508 = vmax.f32 %v1240, 0.0
      %v1509 = vmax.f32 %v1245, 0.0
      %v1510 = vmax.f32 %v1248, 0.0
      %v1511 = vmax.f32 %v1253, 0.0
      %v1512 = vmax.f32 %v1256, 0.0
      %v1513 = vmax.f32 %v1261, 0.0
      %v1514 = vmax.f32 %v1264, 0.0
      %v1515 = vmax.f32 %v1269, 0.0
      %v1516 = vmax.f32 %v1272, 0.0
      %v1517 = vmax.f32 %v1277, 0.0
      %v1518 = vmax.f32 %v1280, 0.0
      %v1519 = vmax.f32 %v1285, 0.0
      %v1520 = vmax.f32 %v1288, 0.0
      %v1521 = vmax.f32 %v1293, 0.0
      %v1522 = vmax.f32 %v1296, 0.0
      %v1523 = vmax.f32 %v1301, 0.0
      %v1524 = vmax.f32 %v1304, 0.0
      %v1525 = vmax.f32 %v1309, 0.0
      %v1526 = vmax.f32 %v1312, 0.0
      %v1527 = vmax.f32 %v1317, 0.0
      %v1528 = vmax.f32 %v1320, 0.0
      %v1529 = vmax.f32 %v1325, 0.0
      %v1530 = vmax.f32 %v1328, 0.0
      %v1531 = vmax.f32 %v1333, 0.0
      %v1532 = vmax.f32 %v1336, 0.0
      %v1533 = vmax.f32 %v1341, 0.0
      %v1534 = vmax.f32 %v1344, 0.0
      %v1535 = vmax.f32 %v1349, 0.0
      %v1536 = vmax.f32 %v1352, 0.0
      %v1537 = vmax.f32 %v1357, 0.0
      %v1538 = vmax.f32 %v1360, 0.0
      %v1539 = vmax.f32 %v1365, 0.0
      %v1540 = vmax.f32 %v1368, 0.0
      %v1541 = vmax.f32 %v1373, 0.0
      %v1542 = vmax.f32 %v1376, 0.0
      %v1543 = vmax.f32 %v1381, 0.0
      %v1544 = vmax.f32 %v1384, 0.0
      %v1545 = vmax.f32 %v1389, 0.0
      %v1546 = vmax.f32 %v1392, 0.0
      %v1547 = vmax.f32 %v1397, 0.0
      %v1548 = vmax.f32 %v1400, 0.0
      %v1549 = vmax.f32 %v1405, 0.0
      %v1550 = vmax.f32 %v1408, 0.0
      %v1551 = vmax.f32 %v1413, 0.0
      %v1552 = vmax.f32 %v1416, 0.0
      %v1553 = vmax.f32 %v1421, 0.0
      %v1554 = vmax.f32 %v1424, 0.0
      %v1555 = vpack.c.bf16 %v1428, %v1427
      %v1556 = vpack.c.bf16 %v1430, %v1429
      %v1557 = vpack.c.bf16 %v1432, %v1431
      %v1558 = vpack.c.bf16 %v1434, %v1433
      %v1559 = vpack.c.bf16 %v1436, %v1435
      %v1560 = vpack.c.bf16 %v1438, %v1437
      %v1561 = vpack.c.bf16 %v1440, %v1439
      %v1562 = vpack.c.bf16 %v1442, %v1441
      %v1563 = vpack.c.bf16 %v1444, %v1443
      %v1564 = vpack.c.bf16 %v1446, %v1445
      %v1565 = vpack.c.bf16 %v1448, %v1447
      %v1566 = vpack.c.bf16 %v1450, %v1449
      %v1567 = vpack.c.bf16 %v1452, %v1451
      %v1568 = vpack.c.bf16 %v1454, %v1453
      %v1569 = vpack.c.bf16 %v1456, %v1455
      %v1570 = vpack.c.bf16 %v1458, %v1457
      %v1571 = vpack.c.bf16 %v1460, %v1459
      %v1572 = vpack.c.bf16 %v1462, %v1461
      %v1573 = vpack.c.bf16 %v1464, %v1463
      %v1574 = vpack.c.bf16 %v1466, %v1465
      %v1575 = vpack.c.bf16 %v1468, %v1467
      %v1576 = vpack.c.bf16 %v1470, %v1469
      %v1577 = vpack.c.bf16 %v1472, %v1471
      %v1578 = vpack.c.bf16 %v1474, %v1473
      %v1579 = vpack.c.bf16 %v1476, %v1475
      %v1580 = vpack.c.bf16 %v1478, %v1477
      %v1581 = vpack.c.bf16 %v1480, %v1479
      %v1582 = vpack.c.bf16 %v1482, %v1481
      %v1583 = vpack.c.bf16 %v1484, %v1483
      %v1584 = vpack.c.bf16 %v1486, %v1485
      %v1585 = vpack.c.bf16 %v1488, %v1487
      %v1586 = vpack.c.bf16 %v1490, %v1489
      %v1587 = vpack.c.bf16 %v1492, %v1491
      %v1588 = vpack.c.bf16 %v1494, %v1493
      %v1589 = vpack.c.bf16 %v1496, %v1495
      %v1590 = vpack.c.bf16 %v1498, %v1497
      %v1591 = vpack.c.bf16 %v1500, %v1499
      %v1592 = vpack.c.bf16 %v1502, %v1501
      %v1593 = vpack.c.bf16 %v1504, %v1503
      %v1594 = vpack.c.bf16 %v1506, %v1505
      %v1595 = vpack.c.bf16 %v1508, %v1507
      %v1596 = vpack.c.bf16 %v1510, %v1509
      %v1597 = vpack.c.bf16 %v1512, %v1511
      %v1598 = vpack.c.bf16 %v1514, %v1513
      %v1599 = vpack.c.bf16 %v1516, %v1515
      %v1600 = vpack.c.bf16 %v1518, %v1517
      %v1601 = vpack.c.bf16 %v1520, %v1519
      %v1602 = vpack.c.bf16 %v1522, %v1521
      %v1603 = vpack.c.bf16 %v1524, %v1523
      %v1604 = vpack.c.bf16 %v1526, %v1525
      %v1605 = vpack.c.bf16 %v1528, %v1527
      %v1606 = vpack.c.bf16 %v1530, %v1529
      %v1607 = vpack.c.bf16 %v1532, %v1531
      %v1608 = vpack.c.bf16 %v1534, %v1533
      %v1609 = vpack.c.bf16 %v1536, %v1535
      %v1610 = vpack.c.bf16 %v1538, %v1537
      %v1611 = vpack.c.bf16 %v1540, %v1539
      %v1612 = vpack.c.bf16 %v1542, %v1541
      %v1613 = vpack.c.bf16 %v1544, %v1543
      %v1614 = vpack.c.bf16 %v1546, %v1545
      %v1615 = vpack.c.bf16 %v1548, %v1547
      %v1616 = vpack.c.bf16 %v1550, %v1549
      %v1617 = vpack.c.bf16 %v1552, %v1551
      %v1618 = vpack.c.bf16 %v1554, %v1553
      %v1619 = vld [vmem:[%s3] sm:$0xf]
      %v1620 = vld [vmem:[%s3 + $0x4] sm:$0xf]
      %v1621 = vld [vmem:[%s3 + $0x8] sm:$0xf]
      %v1622 = vld [vmem:[%s3 + $0xc] sm:$0xf]
      %v1623 = vld [vmem:[%s3 + $0x10] sm:$0xf]
      %v1624 = vld [vmem:[%s3 + $0x14] sm:$0xf]
      %v1625 = vld [vmem:[%s3 + $0x18] sm:$0xf]
      %v1626 = vld [vmem:[%s3 + $0x1c] sm:$0xf]
      %v1627 = vld [vmem:[%s3 + $0x20] sm:$0xf]
      %v1628 = vld [vmem:[%s3 + $0x24] sm:$0xf]
      %v1629 = vld [vmem:[%s3 + $0x28] sm:$0xf]
      %v1630 = vld [vmem:[%s3 + $0x2c] sm:$0xf]
      %v1631 = vld [vmem:[%s3 + $0x30] sm:$0xf]
      %v1632 = vld [vmem:[%s3 + $0x34] sm:$0xf]
      %v1633 = vld [vmem:[%s3 + $0x38] sm:$0xf]
      %v1634 = vld [vmem:[%s3 + $0x3c] sm:$0xf]
      %v1635 = vld [vmem:[%s4] sm:$0x1]
      %v1637 = vlaneseq
      %v1638 = vshrl.u32 %v1637, 7
      %v1639 = vsub.s32 0, %v1638
      %v1640 = vrot.slane %v1635, %v1639
      %v1658 = vunpack.c.l.b16 %v1619
      %v1659 = vunpack.c.l.b16 %v1620
      %v1660 = vunpack.c.l.b16 %v1621
      %v1661 = vunpack.c.l.b16 %v1622
      %v1662 = vunpack.c.l.b16 %v1623
      %v1663 = vunpack.c.l.b16 %v1624
      %v1664 = vunpack.c.l.b16 %v1625
      %v1665 = vunpack.c.l.b16 %v1626
      %v1666 = vunpack.c.l.b16 %v1627
      %v1667 = vunpack.c.l.b16 %v1628
      %v1668 = vunpack.c.l.b16 %v1629
      %v1669 = vunpack.c.l.b16 %v1630
      %v1670 = vunpack.c.l.b16 %v1631
      %v1671 = vunpack.c.l.b16 %v1632
      %v1672 = vunpack.c.l.b16 %v1633
      %v1673 = vunpack.c.l.b16 %v1634
      %v1674 = vpack.c.b16 %v1659, %v1658
      %v1675 = vpack.c.b16 %v1661, %v1660
      %v1676 = vpack.c.b16 %v1663, %v1662
      %v1677 = vpack.c.b16 %v1665, %v1664
      %v1678 = vpack.c.b16 %v1667, %v1666
      %v1679 = vpack.c.b16 %v1669, %v1668
      %v1680 = vpack.c.b16 %v1671, %v1670
      %v1681 = vpack.c.b16 %v1673, %v1672
      %1690 = vmatprep.subr.bf16.mxu0 0
      %1691 = vmatpush1.bf16.msra.mxu0 %v1674
      %1692 = vmatprep.subr.bf16.mxu0 0
      %1693 = vmatpush1.bf16.msra.mxu0 %v1675
      %1694 = vmatprep.subr.bf16.mxu0 0
      %1695 = vmatpush1.bf16.msra.mxu0 %v1676
      %1696 = vmatprep.subr.bf16.mxu0 0
      %1697 = vmatpush1.bf16.msra.mxu0 %v1677
      %1698 = vmatprep.subr.bf16.mxu0 0
      %1699 = vmatpush1.bf16.msra.mxu0 %v1678
      %1700 = vmatprep.subr.bf16.mxu0 0
      %1701 = vmatpush1.bf16.msra.mxu0 %v1679
      %1702 = vmatprep.subr.bf16.mxu0 0
      %1703 = vmatpush1.bf16.msra.mxu0 %v1680
      %1704 = vmatprep.subr.bf16.mxu0 0
      %1705 = vmatpush1.bf16.msra.mxu0 %v1681
      %1706 = vmatprep.subr.bf16.mxu0 0
      %1707 = vmatpush1.bf16.msra.mxu0 0
      %1708 = vmatprep.subr.bf16.mxu0 0
      %1709 = vmatpush1.bf16.msra.mxu0 0
      %1710 = vmatprep.subr.bf16.mxu0 0
      %1711 = vmatpush1.bf16.msra.mxu0 0
      %1712 = vmatprep.subr.bf16.mxu0 0
      %1713 = vmatpush1.bf16.msra.mxu0 0
      %1714 = vmatprep.subr.bf16.mxu0 0
      %1715 = vmatpush1.bf16.msra.mxu0 0
      %1716 = vmatprep.subr.bf16.mxu0 0
      %1717 = vmatpush1.bf16.msra.mxu0 0
      %1718 = vmatprep.subr.bf16.mxu0 0
      %1719 = vmatpush1.bf16.msra.mxu0 0
      %1720 = vmatprep.subr.bf16.mxu0 0
      %1721 = vmatpush1.bf16.msra.mxu0 0
      %1722 = vmatprep.mubr.bf16.mxu0 0
      %1723 = vmatmul.mubr.bf16.gmra.mrb[0].mxu0 %v1555
      %v1724 = vpop.f32.mrb[0].mxu0
      %v1725 = vadd.f32 %v1640, %v1724
      %v1726 = vpop.f32.mrb[0].mxu0
      %v1727 = vpop.f32.mrb[0].mxu0
      %v1728 = vadd.f32 %v1640, %v1727
      %v1729 = vpop.f32.mrb[0].mxu0
      %1730 = vmatprep.mubr.bf16.mxu0 0
      %1731 = vmatmul.mubr.bf16.gmra.mrb[0].mxu0 %v1556
      %v1732 = vpop.f32.mrb[0].mxu0
      %v1733 = vadd.f32 %v1640, %v1732
      %v1734 = vpop.f32.mrb[0].mxu0
      %v1735 = vpop.f32.mrb[0].mxu0
      %v1736 = vadd.f32 %v1640, %v1735
      %v1737 = vpop.f32.mrb[0].mxu0
      %1738 = vmatprep.mubr.bf16.mxu0 0
      %1739 = vmatmul.mubr.bf16.gmra.mrb[0].mxu0 %v1557
      %v1740 = vpop.f32.mrb[0].mxu0
      %v1741 = vadd.f32 %v1640, %v1740
      %v1742 = vpop.f32.mrb[0].mxu0
      %v1743 = vpop.f32.mrb[0].mxu0
      %v1744 = vadd.f32 %v1640, %v1743
      %v1745 = vpop.f32.mrb[0].mxu0
      %1746 = vmatprep.mubr.bf16.mxu0 0
      %1747 = vmatmul.mubr.bf16.gmra.mrb[0].mxu0 %v1558
      %v1748 = vpop.f32.mrb[0].mxu0
      %v1749 = vadd.f32 %v1640, %v1748
      %v1750 = vpop.f32.mrb[0].mxu0
      %v1751 = vpop.f32.mrb[0].mxu0
      %v1752 = vadd.f32 %v1640, %v1751
      %v1753 = vpop.f32.mrb[0].mxu0
      %1754 = vmatprep.mubr.bf16.mxu0 0
      %1755 = vmatmul.mubr.bf16.gmra.mrb[0].mxu0 %v1559
      %v1756 = vpop.f32.mrb[0].mxu0
      %v1757 = vadd.f32 %v1640, %v1756
      %v1758 = vpop.f32.mrb[0].mxu0
      %v1759 = vpop.f32.mrb[0].mxu0
      %v1760 = vadd.f32 %v1640, %v1759
      %v1761 = vpop.f32.mrb[0].mxu0
      %1762 = vmatprep.mubr.bf16.mxu0 0
      %1763 = vmatmul.mubr.bf16.gmra.mrb[0].mxu0 %v1560
      %v1764 = vpop.f32.mrb[0].mxu0
      %v1765 = vadd.f32 %v1640, %v1764
      %v1766 = vpop.f32.mrb[0].mxu0
      %v1767 = vpop.f32.mrb[0].mxu0
      %v1768 = vadd.f32 %v1640, %v1767
      %v1769 = vpop.f32.mrb[0].mxu0
      %1770 = vmatprep.mubr.bf16.mxu0 0
      %1771 = vmatmul.mubr.bf16.gmra.mrb[0].mxu0 %v1561
      %v1772 = vpop.f32.mrb[0].mxu0
      %v1773 = vadd.f32 %v1640, %v1772
      %v1774 = vpop.f32.mrb[0].mxu0
      %v1775 = vpop.f32.mrb[0].mxu0
      %v1776 = vadd.f32 %v1640, %v1775
      %v1777 = vpop.f32.mrb[0].mxu0
      %1778 = vmatprep.mubr.bf16.mxu0 0
      %1779 = vmatmul.mubr.bf16.gmra.mrb[0].mxu0 %v1562
      %v1780 = vpop.f32.mrb[0].mxu0
      %v1781 = vadd.f32 %v1640, %v1780
      %v1782 = vpop.f32.mrb[0].mxu0
      %v1783 = vpop.f32.mrb[0].mxu0
      %v1784 = vadd.f32 %v1640, %v1783
      %v1785 = vpop.f32.mrb[0].mxu0
      %1786 = vmatprep.mubr.bf16.mxu0 0
      %1787 = vmatmul.mubr.bf16.gmra.mrb[0].mxu0 %v1563
      %v1788 = vpop.f32.mrb[0].mxu0
      %v1789 = vadd.f32 %v1640, %v1788
      %v1790 = vpop.f32.mrb[0].mxu0
      %v1791 = vpop.f32.mrb[0].mxu0
      %v1792 = vadd.f32 %v1640, %v1791
      %v1793 = vpop.f32.mrb[0].mxu0
      %1794 = vmatprep.mubr.bf16.mxu0 0
      %1795 = vmatmul.mubr.bf16.gmra.mrb[0].mxu0 %v1564
      %v1796 = vpop.f32.mrb[0].mxu0
      %v1797 = vadd.f32 %v1640, %v1796
      %v1798 = vpop.f32.mrb[0].mxu0
      %v1799 = vpop.f32.mrb[0].mxu0
      %v1800 = vadd.f32 %v1640, %v1799
      %v1801 = vpop.f32.mrb[0].mxu0
      %1802 = vmatprep.mubr.bf16.mxu0 0
      %1803 = vmatmul.mubr.bf16.gmra.mrb[0].mxu0 %v1565
      %v1804 = vpop.f32.mrb[0].mxu0
      %v1805 = vadd.f32 %v1640, %v1804
      %v1806 = vpop.f32.mrb[0].mxu0
      %v1807 = vpop.f32.mrb[0].mxu0
      %v1808 = vadd.f32 %v1640, %v1807
      %v1809 = vpop.f32.mrb[0].mxu0
      %1810 = vmatprep.mubr.bf16.mxu0 0
      %1811 = vmatmul.mubr.bf16.gmra.mrb[0].mxu0 %v1566
      %v1812 = vpop.f32.mrb[0].mxu0
      %v1813 = vadd.f32 %v1640, %v1812
      %v1814 = vpop.f32.mrb[0].mxu0
      %v1815 = vpop.f32.mrb[0].mxu0
      %v1816 = vadd.f32 %v1640, %v1815
      %v1817 = vpop.f32.mrb[0].mxu0
      %1818 = vmatprep.mubr.bf16.mxu0 0
      %1819 = vmatmul.mubr.bf16.gmra.mrb[0].mxu0 %v1567
      %v1820 = vpop.f32.mrb[0].mxu0
      %v1821 = vadd.f32 %v1640, %v1820
      %v1822 = vpop.f32.mrb[0].mxu0
      %v1823 = vpop.f32.mrb[0].mxu0
      %v1824 = vadd.f32 %v1640, %v1823
      %v1825 = vpop.f32.mrb[0].mxu0
      %1826 = vmatprep.mubr.bf16.mxu0 0
      %1827 = vmatmul.mubr.bf16.gmra.mrb[0].mxu0 %v1568
      %v1828 = vpop.f32.mrb[0].mxu0
      %v1829 = vadd.f32 %v1640, %v1828
      %v1830 = vpop.f32.mrb[0].mxu0
      %v1831 = vpop.f32.mrb[0].mxu0
      %v1832 = vadd.f32 %v1640, %v1831
      %v1833 = vpop.f32.mrb[0].mxu0
      %1834 = vmatprep.mubr.bf16.mxu0 0
      %1835 = vmatmul.mubr.bf16.gmra.mrb[0].mxu0 %v1569
      %v1836 = vpop.f32.mrb[0].mxu0
      %v1837 = vadd.f32 %v1640, %v1836
      %v1838 = vpop.f32.mrb[0].mxu0
      %v1839 = vpop.f32.mrb[0].mxu0
      %v1840 = vadd.f32 %v1640, %v1839
      %v1841 = vpop.f32.mrb[0].mxu0
      %1842 = vmatprep.mubr.bf16.mxu0 0
      %1843 = vmatmul.mubr.bf16.gmra.mrb[0].mxu0 %v1570
      %v1844 = vpop.f32.mrb[0].mxu0
      %v1845 = vadd.f32 %v1640, %v1844
      %v1846 = vpop.f32.mrb[0].mxu0
      %v1847 = vpop.f32.mrb[0].mxu0
      %v1848 = vadd.f32 %v1640, %v1847
      %v1849 = vpop.f32.mrb[0].mxu0
      %1850 = vmatprep.mubr.bf16.mxu0 0
      %1851 = vmatmul.mubr.bf16.gmra.mrb[0].mxu0 %v1571
      %v1852 = vpop.f32.mrb[0].mxu0
      %v1853 = vadd.f32 %v1640, %v1852
      %v1854 = vpop.f32.mrb[0].mxu0
      %v1855 = vpop.f32.mrb[0].mxu0
      %v1856 = vadd.f32 %v1640, %v1855
      %v1857 = vpop.f32.mrb[0].mxu0
      %1858 = vmatprep.mubr.bf16.mxu0 0
      %1859 = vmatmul.mubr.bf16.gmra.mrb[0].mxu0 %v1572
      %v1860 = vpop.f32.mrb[0].mxu0
      %v1861 = vadd.f32 %v1640, %v1860
      %v1862 = vpop.f32.mrb[0].mxu0
      %v1863 = vpop.f32.mrb[0].mxu0
      %v1864 = vadd.f32 %v1640, %v1863
      %v1865 = vpop.f32.mrb[0].mxu0
      %1866 = vmatprep.mubr.bf16.mxu0 0
      %1867 = vmatmul.mubr.bf16.gmra.mrb[0].mxu0 %v1573
      %v1868 = vpop.f32.mrb[0].mxu0
      %v1869 = vadd.f32 %v1640, %v1868
      %v1870 = vpop.f32.mrb[0].mxu0
      %v1871 = vpop.f32.mrb[0].mxu0
      %v1872 = vadd.f32 %v1640, %v1871
      %v1873 = vpop.f32.mrb[0].mxu0
      %1874 = vmatprep.mubr.bf16.mxu0 0
      %1875 = vmatmul.mubr.bf16.gmra.mrb[0].mxu0 %v1574
      %v1876 = vpop.f32.mrb[0].mxu0
      %v1877 = vadd.f32 %v1640, %v1876
      %v1878 = vpop.f32.mrb[0].mxu0
      %v1879 = vpop.f32.mrb[0].mxu0
      %v1880 = vadd.f32 %v1640, %v1879
      %v1881 = vpop.f32.mrb[0].mxu0
      %1882 = vmatprep.mubr.bf16.mxu0 0
      %1883 = vmatmul.mubr.bf16.gmra.mrb[0].mxu0 %v1575
      %v1884 = vpop.f32.mrb[0].mxu0
      %v1885 = vadd.f32 %v1640, %v1884
      %v1886 = vpop.f32.mrb[0].mxu0
      %v1887 = vpop.f32.mrb[0].mxu0
      %v1888 = vadd.f32 %v1640, %v1887
      %v1889 = vpop.f32.mrb[0].mxu0
      %1890 = vmatprep.mubr.bf16.mxu0 0
      %1891 = vmatmul.mubr.bf16.gmra.mrb[0].mxu0 %v1576
      %v1892 = vpop.f32.mrb[0].mxu0
      %v1893 = vadd.f32 %v1640, %v1892
      %v1894 = vpop.f32.mrb[0].mxu0
      %v1895 = vpop.f32.mrb[0].mxu0
      %v1896 = vadd.f32 %v1640, %v1895
      %v1897 = vpop.f32.mrb[0].mxu0
      %1898 = vmatprep.mubr.bf16.mxu0 0
      %1899 = vmatmul.mubr.bf16.gmra.mrb[0].mxu0 %v1577
      %v1900 = vpop.f32.mrb[0].mxu0
      %v1901 = vadd.f32 %v1640, %v1900
      %v1902 = vpop.f32.mrb[0].mxu0
      %v1903 = vpop.f32.mrb[0].mxu0
      %v1904 = vadd.f32 %v1640, %v1903
      %v1905 = vpop.f32.mrb[0].mxu0
      %1906 = vmatprep.mubr.bf16.mxu0 0
      %1907 = vmatmul.mubr.bf16.gmra.mrb[0].mxu0 %v1578
      %v1908 = vpop.f32.mrb[0].mxu0
      %v1909 = vadd.f32 %v1640, %v1908
      %v1910 = vpop.f32.mrb[0].mxu0
      %v1911 = vpop.f32.mrb[0].mxu0
      %v1912 = vadd.f32 %v1640, %v1911
      %v1913 = vpop.f32.mrb[0].mxu0
      %1914 = vmatprep.mubr.bf16.mxu0 0
      %1915 = vmatmul.mubr.bf16.gmra.mrb[0].mxu0 %v1579
      %v1916 = vpop.f32.mrb[0].mxu0
      %v1917 = vadd.f32 %v1640, %v1916
      %v1918 = vpop.f32.mrb[0].mxu0
      %v1919 = vpop.f32.mrb[0].mxu0
      %v1920 = vadd.f32 %v1640, %v1919
      %v1921 = vpop.f32.mrb[0].mxu0
      %1922 = vmatprep.mubr.bf16.mxu0 0
      %1923 = vmatmul.mubr.bf16.gmra.mrb[0].mxu0 %v1580
      %v1924 = vpop.f32.mrb[0].mxu0
      %v1925 = vadd.f32 %v1640, %v1924
      %v1926 = vpop.f32.mrb[0].mxu0
      %v1927 = vpop.f32.mrb[0].mxu0
      %v1928 = vadd.f32 %v1640, %v1927
      %v1929 = vpop.f32.mrb[0].mxu0
      %1930 = vmatprep.mubr.bf16.mxu0 0
      %1931 = vmatmul.mubr.bf16.gmra.mrb[0].mxu0 %v1581
      %v1932 = vpop.f32.mrb[0].mxu0
      %v1933 = vadd.f32 %v1640, %v1932
      %v1934 = vpop.f32.mrb[0].mxu0
      %v1935 = vpop.f32.mrb[0].mxu0
      %v1936 = vadd.f32 %v1640, %v1935
      %v1937 = vpop.f32.mrb[0].mxu0
      %1938 = vmatprep.mubr.bf16.mxu0 0
      %1939 = vmatmul.mubr.bf16.gmra.mrb[0].mxu0 %v1582
      %v1940 = vpop.f32.mrb[0].mxu0
      %v1941 = vadd.f32 %v1640, %v1940
      %v1942 = vpop.f32.mrb[0].mxu0
      %v1943 = vpop.f32.mrb[0].mxu0
      %v1944 = vadd.f32 %v1640, %v1943
      %v1945 = vpop.f32.mrb[0].mxu0
      %1946 = vmatprep.mubr.bf16.mxu0 0
      %1947 = vmatmul.mubr.bf16.gmra.mrb[0].mxu0 %v1583
      %v1948 = vpop.f32.mrb[0].mxu0
      %v1949 = vadd.f32 %v1640, %v1948
      %v1950 = vpop.f32.mrb[0].mxu0
      %v1951 = vpop.f32.mrb[0].mxu0
      %v1952 = vadd.f32 %v1640, %v1951
      %v1953 = vpop.f32.mrb[0].mxu0
      %1954 = vmatprep.mubr.bf16.mxu0 0
      %1955 = vmatmul.mubr.bf16.gmra.mrb[0].mxu0 %v1584
      %v1956 = vpop.f32.mrb[0].mxu0
      %v1957 = vadd.f32 %v1640, %v1956
      %v1958 = vpop.f32.mrb[0].mxu0
      %v1959 = vpop.f32.mrb[0].mxu0
      %v1960 = vadd.f32 %v1640, %v1959
      %v1961 = vpop.f32.mrb[0].mxu0
      %1962 = vmatprep.mubr.bf16.mxu0 0
      %1963 = vmatmul.mubr.bf16.gmra.mrb[0].mxu0 %v1585
      %v1964 = vpop.f32.mrb[0].mxu0
      %v1965 = vadd.f32 %v1640, %v1964
      %v1966 = vpop.f32.mrb[0].mxu0
      %v1967 = vpop.f32.mrb[0].mxu0
      %v1968 = vadd.f32 %v1640, %v1967
      %v1969 = vpop.f32.mrb[0].mxu0
      %1970 = vmatprep.mubr.bf16.mxu0 0
      %1971 = vmatmul.mubr.bf16.gmra.mrb[0].mxu0 %v1586
      %v1972 = vpop.f32.mrb[0].mxu0
      %v1973 = vadd.f32 %v1640, %v1972
      %v1974 = vpop.f32.mrb[0].mxu0
      %v1975 = vpop.f32.mrb[0].mxu0
      %v1976 = vadd.f32 %v1640, %v1975
      %v1977 = vpop.f32.mrb[0].mxu0
      %1978 = vmatprep.mubr.bf16.mxu0 0
      %1979 = vmatmul.mubr.bf16.gmra.mrb[0].mxu0 %v1587
      %v1980 = vpop.f32.mrb[0].mxu0
      %v1981 = vadd.f32 %v1640, %v1980
      %v1982 = vpop.f32.mrb[0].mxu0
      %v1983 = vpop.f32.mrb[0].mxu0
      %v1984 = vadd.f32 %v1640, %v1983
      %v1985 = vpop.f32.mrb[0].mxu0
      %1986 = vmatprep.mubr.bf16.mxu0 0
      %1987 = vmatmul.mubr.bf16.gmra.mrb[0].mxu0 %v1588
      %v1988 = vpop.f32.mrb[0].mxu0
      %v1989 = vadd.f32 %v1640, %v1988
      %v1990 = vpop.f32.mrb[0].mxu0
      %v1991 = vpop.f32.mrb[0].mxu0
      %v1992 = vadd.f32 %v1640, %v1991
      %v1993 = vpop.f32.mrb[0].mxu0
      %1994 = vmatprep.mubr.bf16.mxu0 0
      %1995 = vmatmul.mubr.bf16.gmra.mrb[0].mxu0 %v1589
      %v1996 = vpop.f32.mrb[0].mxu0
      %v1997 = vadd.f32 %v1640, %v1996
      %v1998 = vpop.f32.mrb[0].mxu0
      %v1999 = vpop.f32.mrb[0].mxu0
      %v2000 = vadd.f32 %v1640, %v1999
      %v2001 = vpop.f32.mrb[0].mxu0
      %2002 = vmatprep.mubr.bf16.mxu0 0
      %2003 = vmatmul.mubr.bf16.gmra.mrb[0].mxu0 %v1590
      %v2004 = vpop.f32.mrb[0].mxu0
      %v2005 = vadd.f32 %v1640, %v2004
      %v2006 = vpop.f32.mrb[0].mxu0
      %v2007 = vpop.f32.mrb[0].mxu0
      %v2008 = vadd.f32 %v1640, %v2007
      %v2009 = vpop.f32.mrb[0].mxu0
      %2010 = vmatprep.mubr.bf16.mxu0 0
      %2011 = vmatmul.mubr.bf16.gmra.mrb[0].mxu0 %v1591
      %v2012 = vpop.f32.mrb[0].mxu0
      %v2013 = vadd.f32 %v1640, %v2012
      %v2014 = vpop.f32.mrb[0].mxu0
      %v2015 = vpop.f32.mrb[0].mxu0
      %v2016 = vadd.f32 %v1640, %v2015
      %v2017 = vpop.f32.mrb[0].mxu0
      %2018 = vmatprep.mubr.bf16.mxu0 0
      %2019 = vmatmul.mubr.bf16.gmra.mrb[0].mxu0 %v1592
      %v2020 = vpop.f32.mrb[0].mxu0
      %v2021 = vadd.f32 %v1640, %v2020
      %v2022 = vpop.f32.mrb[0].mxu0
      %v2023 = vpop.f32.mrb[0].mxu0
      %v2024 = vadd.f32 %v1640, %v2023
      %v2025 = vpop.f32.mrb[0].mxu0
      %2026 = vmatprep.mubr.bf16.mxu0 0
      %2027 = vmatmul.mubr.bf16.gmra.mrb[0].mxu0 %v1593
      %v2028 = vpop.f32.mrb[0].mxu0
      %v2029 = vadd.f32 %v1640, %v2028
      %v2030 = vpop.f32.mrb[0].mxu0
      %v2031 = vpop.f32.mrb[0].mxu0
      %v2032 = vadd.f32 %v1640, %v2031
      %v2033 = vpop.f32.mrb[0].mxu0
      %2034 = vmatprep.mubr.bf16.mxu0 0
      %2035 = vmatmul.mubr.bf16.gmra.mrb[0].mxu0 %v1594
      %v2036 = vpop.f32.mrb[0].mxu0
      %v2037 = vadd.f32 %v1640, %v2036
      %v2038 = vpop.f32.mrb[0].mxu0
      %v2039 = vpop.f32.mrb[0].mxu0
      %v2040 = vadd.f32 %v1640, %v2039
      %v2041 = vpop.f32.mrb[0].mxu0
      %2042 = vmatprep.mubr.bf16.mxu0 0
      %2043 = vmatmul.mubr.bf16.gmra.mrb[0].mxu0 %v1595
      %v2044 = vpop.f32.mrb[0].mxu0
      %v2045 = vadd.f32 %v1640, %v2044
      %v2046 = vpop.f32.mrb[0].mxu0
      %v2047 = vpop.f32.mrb[0].mxu0
      %v2048 = vadd.f32 %v1640, %v2047
      %v2049 = vpop.f32.mrb[0].mxu0
      %2050 = vmatprep.mubr.bf16.mxu0 0
      %2051 = vmatmul.mubr.bf16.gmra.mrb[0].mxu0 %v1596
      %v2052 = vpop.f32.mrb[0].mxu0
      %v2053 = vadd.f32 %v1640, %v2052
      %v2054 = vpop.f32.mrb[0].mxu0
      %v2055 = vpop.f32.mrb[0].mxu0
      %v2056 = vadd.f32 %v1640, %v2055
      %v2057 = vpop.f32.mrb[0].mxu0
      %2058 = vmatprep.mubr.bf16.mxu0 0
      %2059 = vmatmul.mubr.bf16.gmra.mrb[0].mxu0 %v1597
      %v2060 = vpop.f32.mrb[0].mxu0
      %v2061 = vadd.f32 %v1640, %v2060
      %v2062 = vpop.f32.mrb[0].mxu0
      %v2063 = vpop.f32.mrb[0].mxu0
      %v2064 = vadd.f32 %v1640, %v2063
      %v2065 = vpop.f32.mrb[0].mxu0
      %2066 = vmatprep.mubr.bf16.mxu0 0
      %2067 = vmatmul.mubr.bf16.gmra.mrb[0].mxu0 %v1598
      %v2068 = vpop.f32.mrb[0].mxu0
      %v2069 = vadd.f32 %v1640, %v2068
      %v2070 = vpop.f32.mrb[0].mxu0
      %v2071 = vpop.f32.mrb[0].mxu0
      %v2072 = vadd.f32 %v1640, %v2071
      %v2073 = vpop.f32.mrb[0].mxu0
      %2074 = vmatprep.mubr.bf16.mxu0 0
      %2075 = vmatmul.mubr.bf16.gmra.mrb[0].mxu0 %v1599
      %v2076 = vpop.f32.mrb[0].mxu0
      %v2077 = vadd.f32 %v1640, %v2076
      %v2078 = vpop.f32.mrb[0].mxu0
      %v2079 = vpop.f32.mrb[0].mxu0
      %v2080 = vadd.f32 %v1640, %v2079
      %v2081 = vpop.f32.mrb[0].mxu0
      %2082 = vmatprep.mubr.bf16.mxu0 0
      %2083 = vmatmul.mubr.bf16.gmra.mrb[0].mxu0 %v1600
      %v2084 = vpop.f32.mrb[0].mxu0
      %v2085 = vadd.f32 %v1640, %v2084
      %v2086 = vpop.f32.mrb[0].mxu0
      %v2087 = vpop.f32.mrb[0].mxu0
      %v2088 = vadd.f32 %v1640, %v2087
      %v2089 = vpop.f32.mrb[0].mxu0
      %2090 = vmatprep.mubr.bf16.mxu0 0
      %2091 = vmatmul.mubr.bf16.gmra.mrb[0].mxu0 %v1601
      %v2092 = vpop.f32.mrb[0].mxu0
      %v2093 = vadd.f32 %v1640, %v2092
      %v2094 = vpop.f32.mrb[0].mxu0
      %v2095 = vpop.f32.mrb[0].mxu0
      %v2096 = vadd.f32 %v1640, %v2095
      %v2097 = vpop.f32.mrb[0].mxu0
      %2098 = vmatprep.mubr.bf16.mxu0 0
      %2099 = vmatmul.mubr.bf16.gmra.mrb[0].mxu0 %v1602
      %v2100 = vpop.f32.mrb[0].mxu0
      %v2101 = vadd.f32 %v1640, %v2100
      %v2102 = vpop.f32.mrb[0].mxu0
      %v2103 = vpop.f32.mrb[0].mxu0
      %v2104 = vadd.f32 %v1640, %v2103
      %v2105 = vpop.f32.mrb[0].mxu0
      %2106 = vmatprep.mubr.bf16.mxu0 0
      %2107 = vmatmul.mubr.bf16.gmra.mrb[0].mxu0 %v1603
      %v2108 = vpop.f32.mrb[0].mxu0
      %v2109 = vadd.f32 %v1640, %v2108
      %v2110 = vpop.f32.mrb[0].mxu0
      %v2111 = vpop.f32.mrb[0].mxu0
      %v2112 = vadd.f32 %v1640, %v2111
      %v2113 = vpop.f32.mrb[0].mxu0
      %2114 = vmatprep.mubr.bf16.mxu0 0
      %2115 = vmatmul.mubr.bf16.gmra.mrb[0].mxu0 %v1604
      %v2116 = vpop.f32.mrb[0].mxu0
      %v2117 = vadd.f32 %v1640, %v2116
      %v2118 = vpop.f32.mrb[0].mxu0
      %v2119 = vpop.f32.mrb[0].mxu0
      %v2120 = vadd.f32 %v1640, %v2119
      %v2121 = vpop.f32.mrb[0].mxu0
      %2122 = vmatprep.mubr.bf16.mxu0 0
      %2123 = vmatmul.mubr.bf16.gmra.mrb[0].mxu0 %v1605
      %v2124 = vpop.f32.mrb[0].mxu0
      %v2125 = vadd.f32 %v1640, %v2124
      %v2126 = vpop.f32.mrb[0].mxu0
      %v2127 = vpop.f32.mrb[0].mxu0
      %v2128 = vadd.f32 %v1640, %v2127
      %v2129 = vpop.f32.mrb[0].mxu0
      %2130 = vmatprep.mubr.bf16.mxu0 0
      %2131 = vmatmul.mubr.bf16.gmra.mrb[0].mxu0 %v1606
      %v2132 = vpop.f32.mrb[0].mxu0
      %v2133 = vadd.f32 %v1640, %v2132
      %v2134 = vpop.f32.mrb[0].mxu0
      %v2135 = vpop.f32.mrb[0].mxu0
      %v2136 = vadd.f32 %v1640, %v2135
      %v2137 = vpop.f32.mrb[0].mxu0
      %2138 = vmatprep.mubr.bf16.mxu0 0
      %2139 = vmatmul.mubr.bf16.gmra.mrb[0].mxu0 %v1607
      %v2140 = vpop.f32.mrb[0].mxu0
      %v2141 = vadd.f32 %v1640, %v2140
      %v2142 = vpop.f32.mrb[0].mxu0
      %v2143 = vpop.f32.mrb[0].mxu0
      %v2144 = vadd.f32 %v1640, %v2143
      %v2145 = vpop.f32.mrb[0].mxu0
      %2146 = vmatprep.mubr.bf16.mxu0 0
      %2147 = vmatmul.mubr.bf16.gmra.mrb[0].mxu0 %v1608
      %v2148 = vpop.f32.mrb[0].mxu0
      %v2149 = vadd.f32 %v1640, %v2148
      %v2150 = vpop.f32.mrb[0].mxu0
      %v2151 = vpop.f32.mrb[0].mxu0
      %v2152 = vadd.f32 %v1640, %v2151
      %v2153 = vpop.f32.mrb[0].mxu0
      %2154 = vmatprep.mubr.bf16.mxu0 0
      %2155 = vmatmul.mubr.bf16.gmra.mrb[0].mxu0 %v1609
      %v2156 = vpop.f32.mrb[0].mxu0
      %v2157 = vadd.f32 %v1640, %v2156
      %v2158 = vpop.f32.mrb[0].mxu0
      %v2159 = vpop.f32.mrb[0].mxu0
      %v2160 = vadd.f32 %v1640, %v2159
      %v2161 = vpop.f32.mrb[0].mxu0
      %2162 = vmatprep.mubr.bf16.mxu0 0
      %2163 = vmatmul.mubr.bf16.gmra.mrb[0].mxu0 %v1610
      %v2164 = vpop.f32.mrb[0].mxu0
      %v2165 = vadd.f32 %v1640, %v2164
      %v2166 = vpop.f32.mrb[0].mxu0
      %v2167 = vpop.f32.mrb[0].mxu0
      %v2168 = vadd.f32 %v1640, %v2167
      %v2169 = vpop.f32.mrb[0].mxu0
      %2170 = vmatprep.mubr.bf16.mxu0 0
      %2171 = vmatmul.mubr.bf16.gmra.mrb[0].mxu0 %v1611
      %v2172 = vpop.f32.mrb[0].mxu0
      %v2173 = vadd.f32 %v1640, %v2172
      %v2174 = vpop.f32.mrb[0].mxu0
      %v2175 = vpop.f32.mrb[0].mxu0
      %v2176 = vadd.f32 %v1640, %v2175
      %v2177 = vpop.f32.mrb[0].mxu0
      %2178 = vmatprep.mubr.bf16.mxu0 0
      %2179 = vmatmul.mubr.bf16.gmra.mrb[0].mxu0 %v1612
      %v2180 = vpop.f32.mrb[0].mxu0
      %v2181 = vadd.f32 %v1640, %v2180
      %v2182 = vpop.f32.mrb[0].mxu0
      %v2183 = vpop.f32.mrb[0].mxu0
      %v2184 = vadd.f32 %v1640, %v2183
      %v2185 = vpop.f32.mrb[0].mxu0
      %2186 = vmatprep.mubr.bf16.mxu0 0
      %2187 = vmatmul.mubr.bf16.gmra.mrb[0].mxu0 %v1613
      %v2188 = vpop.f32.mrb[0].mxu0
      %v2189 = vadd.f32 %v1640, %v2188
      %v2190 = vpop.f32.mrb[0].mxu0
      %v2191 = vpop.f32.mrb[0].mxu0
      %v2192 = vadd.f32 %v1640, %v2191
      %v2193 = vpop.f32.mrb[0].mxu0
      %2194 = vmatprep.mubr.bf16.mxu0 0
      %2195 = vmatmul.mubr.bf16.gmra.mrb[0].mxu0 %v1614
      %v2196 = vpop.f32.mrb[0].mxu0
      %v2197 = vadd.f32 %v1640, %v2196
      %v2198 = vpop.f32.mrb[0].mxu0
      %v2199 = vpop.f32.mrb[0].mxu0
      %v2200 = vadd.f32 %v1640, %v2199
      %v2201 = vpop.f32.mrb[0].mxu0
      %2202 = vmatprep.mubr.bf16.mxu0 0
      %2203 = vmatmul.mubr.bf16.gmra.mrb[0].mxu0 %v1615
      %v2204 = vpop.f32.mrb[0].mxu0
      %v2205 = vadd.f32 %v1640, %v2204
      %v2206 = vpop.f32.mrb[0].mxu0
      %v2207 = vpop.f32.mrb[0].mxu0
      %v2208 = vadd.f32 %v1640, %v2207
      %v2209 = vpop.f32.mrb[0].mxu0
      %2210 = vmatprep.mubr.bf16.mxu0 0
      %2211 = vmatmul.mubr.bf16.gmra.mrb[0].mxu0 %v1616
      %v2212 = vpop.f32.mrb[0].mxu0
      %v2213 = vadd.f32 %v1640, %v2212
      %v2214 = vpop.f32.mrb[0].mxu0
      %v2215 = vpop.f32.mrb[0].mxu0
      %v2216 = vadd.f32 %v1640, %v2215
      %v2217 = vpop.f32.mrb[0].mxu0
      %2218 = vmatprep.mubr.bf16.mxu0 0
      %2219 = vmatmul.mubr.bf16.gmra.mrb[0].mxu0 %v1617
      %v2220 = vpop.f32.mrb[0].mxu0
      %v2221 = vadd.f32 %v1640, %v2220
      %v2222 = vpop.f32.mrb[0].mxu0
      %v2223 = vpop.f32.mrb[0].mxu0
      %v2224 = vadd.f32 %v1640, %v2223
      %v2225 = vpop.f32.mrb[0].mxu0
      %2226 = vmatprep.mubr.bf16.mxu0 0
      %2227 = vmatmul.mubr.bf16.gmra.mrb[0].mxu0 %v1618
      %v2228 = vpop.f32.mrb[0].mxu0
      %v2229 = vadd.f32 %v1640, %v2228
      %v2230 = vpop.f32.mrb[0].mxu0
      %v2231 = vpop.f32.mrb[0].mxu0
      %v2232 = vadd.f32 %v1640, %v2231
      %v2233 = vpop.f32.mrb[0].mxu0
      %2234 = vdwg.mxu0
      %vm2235 = vcmask 31744
      %2236 = vst.msk [vmem:[%s226] sm:$0xff] %vm2235, %v1725
      %2237 = vst.msk [vmem:[%s226 + $0x8] sm:$0xff] %vm2235, %v1728
      %2238 = vst.msk [vmem:[%s226 + $0x10] sm:$0xff] %vm2235, %v1733
      %2239 = vst.msk [vmem:[%s226 + $0x18] sm:$0xff] %vm2235, %v1736
      %2240 = vst.msk [vmem:[%s226 + $0x20] sm:$0xff] %vm2235, %v1741
      %2241 = vst.msk [vmem:[%s226 + $0x28] sm:$0xff] %vm2235, %v1744
      %2242 = vst.msk [vmem:[%s226 + $0x30] sm:$0xff] %vm2235, %v1749
      %2243 = vst.msk [vmem:[%s226 + $0x38] sm:$0xff] %vm2235, %v1752
      %2244 = vst.msk [vmem:[%s226 + $0x40] sm:$0xff] %vm2235, %v1757
      %2245 = vst.msk [vmem:[%s226 + $0x48] sm:$0xff] %vm2235, %v1760
      %2246 = vst.msk [vmem:[%s226 + $0x50] sm:$0xff] %vm2235, %v1765
      %2247 = vst.msk [vmem:[%s226 + $0x58] sm:$0xff] %vm2235, %v1768
      %2248 = vst.msk [vmem:[%s226 + $0x60] sm:$0xff] %vm2235, %v1773
      %2249 = vst.msk [vmem:[%s226 + $0x68] sm:$0xff] %vm2235, %v1776
      %2250 = vst.msk [vmem:[%s226 + $0x70] sm:$0xff] %vm2235, %v1781
      %2251 = vst.msk [vmem:[%s226 + $0x78] sm:$0xff] %vm2235, %v1784
      %2252 = vst.msk [vmem:[%s226 + $0x80] sm:$0xff] %vm2235, %v1789
      %2253 = vst.msk [vmem:[%s226 + $0x88] sm:$0xff] %vm2235, %v1792
      %2254 = vst.msk [vmem:[%s226 + $0x90] sm:$0xff] %vm2235, %v1797
      %2255 = vst.msk [vmem:[%s226 + $0x98] sm:$0xff] %vm2235, %v1800
      %2256 = vst.msk [vmem:[%s226 + $0xa0] sm:$0xff] %vm2235, %v1805
      %2257 = vst.msk [vmem:[%s226 + $0xa8] sm:$0xff] %vm2235, %v1808
      %2258 = vst.msk [vmem:[%s226 + $0xb0] sm:$0xff] %vm2235, %v1813
      %2259 = vst.msk [vmem:[%s226 + $0xb8] sm:$0xff] %vm2235, %v1816
      %2260 = vst.msk [vmem:[%s226 + $0xc0] sm:$0xff] %vm2235, %v1821
      %2261 = vst.msk [vmem:[%s226 + $0xc8] sm:$0xff] %vm2235, %v1824
      %2262 = vst.msk [vmem:[%s226 + $0xd0] sm:$0xff] %vm2235, %v1829
      %2263 = vst.msk [vmem:[%s226 + $0xd8] sm:$0xff] %vm2235, %v1832
      %2264 = vst.msk [vmem:[%s226 + $0xe0] sm:$0xff] %vm2235, %v1837
      %2265 = vst.msk [vmem:[%s226 + $0xe8] sm:$0xff] %vm2235, %v1840
      %2266 = vst.msk [vmem:[%s226 + $0xf0] sm:$0xff] %vm2235, %v1845
      %2267 = vst.msk [vmem:[%s226 + $0xf8] sm:$0xff] %vm2235, %v1848
      %2268 = vst.msk [vmem:[%s226 + $0x100] sm:$0xff] %vm2235, %v1853
      %2269 = vst.msk [vmem:[%s226 + $0x108] sm:$0xff] %vm2235, %v1856
      %2270 = vst.msk [vmem:[%s226 + $0x110] sm:$0xff] %vm2235, %v1861
      %2271 = vst.msk [vmem:[%s226 + $0x118] sm:$0xff] %vm2235, %v1864
      %2272 = vst.msk [vmem:[%s226 + $0x120] sm:$0xff] %vm2235, %v1869
      %2273 = vst.msk [vmem:[%s226 + $0x128] sm:$0xff] %vm2235, %v1872
      %2274 = vst.msk [vmem:[%s226 + $0x130] sm:$0xff] %vm2235, %v1877
      %2275 = vst.msk [vmem:[%s226 + $0x138] sm:$0xff] %vm2235, %v1880
      %2276 = vst.msk [vmem:[%s226 + $0x140] sm:$0xff] %vm2235, %v1885
      %2277 = vst.msk [vmem:[%s226 + $0x148] sm:$0xff] %vm2235, %v1888
      %2278 = vst.msk [vmem:[%s226 + $0x150] sm:$0xff] %vm2235, %v1893
      %2279 = vst.msk [vmem:[%s226 + $0x158] sm:$0xff] %vm2235, %v1896
      %2280 = vst.msk [vmem:[%s226 + $0x160] sm:$0xff] %vm2235, %v1901
      %2281 = vst.msk [vmem:[%s226 + $0x168] sm:$0xff] %vm2235, %v1904
      %2282 = vst.msk [vmem:[%s226 + $0x170] sm:$0xff] %vm2235, %v1909
      %2283 = vst.msk [vmem:[%s226 + $0x178] sm:$0xff] %vm2235, %v1912
      %2284 = vst.msk [vmem:[%s226 + $0x180] sm:$0xff] %vm2235, %v1917
      %2285 = vst.msk [vmem:[%s226 + $0x188] sm:$0xff] %vm2235, %v1920
      %2286 = vst.msk [vmem:[%s226 + $0x190] sm:$0xff] %vm2235, %v1925
      %2287 = vst.msk [vmem:[%s226 + $0x198] sm:$0xff] %vm2235, %v1928
      %2288 = vst.msk [vmem:[%s226 + $0x1a0] sm:$0xff] %vm2235, %v1933
      %2289 = vst.msk [vmem:[%s226 + $0x1a8] sm:$0xff] %vm2235, %v1936
      %2290 = vst.msk [vmem:[%s226 + $0x1b0] sm:$0xff] %vm2235, %v1941
      %2291 = vst.msk [vmem:[%s226 + $0x1b8] sm:$0xff] %vm2235, %v1944
      %2292 = vst.msk [vmem:[%s226 + $0x1c0] sm:$0xff] %vm2235, %v1949
      %2293 = vst.msk [vmem:[%s226 + $0x1c8] sm:$0xff] %vm2235, %v1952
      %2294 = vst.msk [vmem:[%s226 + $0x1d0] sm:$0xff] %vm2235, %v1957
      %2295 = vst.msk [vmem:[%s226 + $0x1d8] sm:$0xff] %vm2235, %v1960
      %2296 = vst.msk [vmem:[%s226 + $0x1e0] sm:$0xff] %vm2235, %v1965
      %2297 = vst.msk [vmem:[%s226 + $0x1e8] sm:$0xff] %vm2235, %v1968
      %2298 = vst.msk [vmem:[%s226 + $0x1f0] sm:$0xff] %vm2235, %v1973
      %2299 = vst.msk [vmem:[%s226 + $0x1f8] sm:$0xff] %vm2235, %v1976
      %2300 = vst.msk [vmem:[%s226 + $0x200] sm:$0xff] %vm2235, %v1981
      %2301 = vst.msk [vmem:[%s226 + $0x208] sm:$0xff] %vm2235, %v1984
      %2302 = vst.msk [vmem:[%s226 + $0x210] sm:$0xff] %vm2235, %v1989
      %2303 = vst.msk [vmem:[%s226 + $0x218] sm:$0xff] %vm2235, %v1992
      %2304 = vst.msk [vmem:[%s226 + $0x220] sm:$0xff] %vm2235, %v1997
      %2305 = vst.msk [vmem:[%s226 + $0x228] sm:$0xff] %vm2235, %v2000
      %2306 = vst.msk [vmem:[%s226 + $0x230] sm:$0xff] %vm2235, %v2005
      %2307 = vst.msk [vmem:[%s226 + $0x238] sm:$0xff] %vm2235, %v2008
      %2308 = vst.msk [vmem:[%s226 + $0x240] sm:$0xff] %vm2235, %v2013
      %2309 = vst.msk [vmem:[%s226 + $0x248] sm:$0xff] %vm2235, %v2016
      %2310 = vst.msk [vmem:[%s226 + $0x250] sm:$0xff] %vm2235, %v2021
      %2311 = vst.msk [vmem:[%s226 + $0x258] sm:$0xff] %vm2235, %v2024
      %2312 = vst.msk [vmem:[%s226 + $0x260] sm:$0xff] %vm2235, %v2029
      %2313 = vst.msk [vmem:[%s226 + $0x268] sm:$0xff] %vm2235, %v2032
      %2314 = vst.msk [vmem:[%s226 + $0x270] sm:$0xff] %vm2235, %v2037
      %2315 = vst.msk [vmem:[%s226 + $0x278] sm:$0xff] %vm2235, %v2040
      %2316 = vst.msk [vmem:[%s226 + $0x280] sm:$0xff] %vm2235, %v2045
      %2317 = vst.msk [vmem:[%s226 + $0x288] sm:$0xff] %vm2235, %v2048
      %2318 = vst.msk [vmem:[%s226 + $0x290] sm:$0xff] %vm2235, %v2053
      %2319 = vst.msk [vmem:[%s226 + $0x298] sm:$0xff] %vm2235, %v2056
      %2320 = vst.msk [vmem:[%s226 + $0x2a0] sm:$0xff] %vm2235, %v2061
      %2321 = vst.msk [vmem:[%s226 + $0x2a8] sm:$0xff] %vm2235, %v2064
      %2322 = vst.msk [vmem:[%s226 + $0x2b0] sm:$0xff] %vm2235, %v2069
      %2323 = vst.msk [vmem:[%s226 + $0x2b8] sm:$0xff] %vm2235, %v2072
      %2324 = vst.msk [vmem:[%s226 + $0x2c0] sm:$0xff] %vm2235, %v2077
      %2325 = vst.msk [vmem:[%s226 + $0x2c8] sm:$0xff] %vm2235, %v2080
      %2326 = vst.msk [vmem:[%s226 + $0x2d0] sm:$0xff] %vm2235, %v2085
      %2327 = vst.msk [vmem:[%s226 + $0x2d8] sm:$0xff] %vm2235, %v2088
      %2328 = vst.msk [vmem:[%s226 + $0x2e0] sm:$0xff] %vm2235, %v2093
      %2329 = vst.msk [vmem:[%s226 + $0x2e8] sm:$0xff] %vm2235, %v2096
      %2330 = vst.msk [vmem:[%s226 + $0x2f0] sm:$0xff] %vm2235, %v2101
      %2331 = vst.msk [vmem:[%s226 + $0x2f8] sm:$0xff] %vm2235, %v2104
      %2332 = vst.msk [vmem:[%s226 + $0x300] sm:$0xff] %vm2235, %v2109
      %2333 = vst.msk [vmem:[%s226 + $0x308] sm:$0xff] %vm2235, %v2112
      %2334 = vst.msk [vmem:[%s226 + $0x310] sm:$0xff] %vm2235, %v2117
      %2335 = vst.msk [vmem:[%s226 + $0x318] sm:$0xff] %vm2235, %v2120
      %2336 = vst.msk [vmem:[%s226 + $0x320] sm:$0xff] %vm2235, %v2125
      %2337 = vst.msk [vmem:[%s226 + $0x328] sm:$0xff] %vm2235, %v2128
      %2338 = vst.msk [vmem:[%s226 + $0x330] sm:$0xff] %vm2235, %v2133
      %2339 = vst.msk [vmem:[%s226 + $0x338] sm:$0xff] %vm2235, %v2136
      %2340 = vst.msk [vmem:[%s226 + $0x340] sm:$0xff] %vm2235, %v2141
      %2341 = vst.msk [vmem:[%s226 + $0x348] sm:$0xff] %vm2235, %v2144
      %2342 = vst.msk [vmem:[%s226 + $0x350] sm:$0xff] %vm2235, %v2149
      %2343 = vst.msk [vmem:[%s226 + $0x358] sm:$0xff] %vm2235, %v2152
      %2344 = vst.msk [vmem:[%s226 + $0x360] sm:$0xff] %vm2235, %v2157
      %2345 = vst.msk [vmem:[%s226 + $0x368] sm:$0xff] %vm2235, %v2160
      %2346 = vst.msk [vmem:[%s226 + $0x370] sm:$0xff] %vm2235, %v2165
      %2347 = vst.msk [vmem:[%s226 + $0x378] sm:$0xff] %vm2235, %v2168
      %2348 = vst.msk [vmem:[%s226 + $0x380] sm:$0xff] %vm2235, %v2173
      %2349 = vst.msk [vmem:[%s226 + $0x388] sm:$0xff] %vm2235, %v2176
      %2350 = vst.msk [vmem:[%s226 + $0x390] sm:$0xff] %vm2235, %v2181
      %2351 = vst.msk [vmem:[%s226 + $0x398] sm:$0xff] %vm2235, %v2184
      %2352 = vst.msk [vmem:[%s226 + $0x3a0] sm:$0xff] %vm2235, %v2189
      %2353 = vst.msk [vmem:[%s226 + $0x3a8] sm:$0xff] %vm2235, %v2192
      %2354 = vst.msk [vmem:[%s226 + $0x3b0] sm:$0xff] %vm2235, %v2197
      %2355 = vst.msk [vmem:[%s226 + $0x3b8] sm:$0xff] %vm2235, %v2200
      %2356 = vst.msk [vmem:[%s226 + $0x3c0] sm:$0xff] %vm2235, %v2205
      %2357 = vst.msk [vmem:[%s226 + $0x3c8] sm:$0xff] %vm2235, %v2208
      %2358 = vst.msk [vmem:[%s226 + $0x3d0] sm:$0xff] %vm2235, %v2213
      %2359 = vst.msk [vmem:[%s226 + $0x3d8] sm:$0xff] %vm2235, %v2216
      %2360 = vst.msk [vmem:[%s226 + $0x3e0] sm:$0xff] %vm2235, %v2221
      %2361 = vst.msk [vmem:[%s226 + $0x3e8] sm:$0xff] %vm2235, %v2224
      %2362 = vst.msk [vmem:[%s226 + $0x3f0] sm:$0xff] %vm2235, %v2229
      %2363 = vst.msk [vmem:[%s226 + $0x3f8] sm:$0xff] %vm2235, %v2232
      %s2364 = smul.u32 128, %s16
      %p2365 = scmp.lt.s32.totalorder %s2364, 255
      %s2366 = scalar_select %p2365, %s2364, 255
      %s2367 = smul.addr %s2366, 8
      %s2368 = scalar_lea.vmem %s5, %s2367
      // Predicated region
      $region41: #{dqn_forward.1} parent=39 // pred_check
        %p2369 = pneg %p144
      $region42: #{dqn_forward.1} parent=39 // pred_check_branch
        %2371 = sbr.rel (%p2369) target = $region44
      $region43: #{dqn_forward.1} parent=39 // pred_region
        %s2372 = smul.u32 128, %s16
      $region44: #{dqn_forward.1} parent=39 // pred_fallthru
        _
    $region40: #{dqn_forward.1} parent=5 // pred_fallthru
      _
    %p2373 = scmp.le.s32.totalorder 2, %s11
    // Predicated region
    $region45: #{dqn_forward.1} parent=5 // pred_check
      %p2374 = pneg %p2373
    $region46: #{dqn_forward.1} parent=5 // pred_check_branch
      %2376 = sbr.rel (%p2374) target = $region48
    $region47: #{dqn_forward.1} parent=5 // pred_region
      %s2377 = ssub.s32 %s11, 2
      // Predicated region
      $region49: #{dqn_forward.1} parent=47 // pred_check
        %p2378 = pneg %p150
      $region50: #{dqn_forward.1} parent=47 // pred_check_branch
        %2380 = sbr.rel (%p2378) target = $region52
      $region51: #{dqn_forward.1} parent=47 // pred_region
        %s2381 = smul.u32 128, %s17
        %p2382 = scmp.lt.s32.totalorder %s2381, 255
        %s2383 = scalar_select %p2382, %s2381, 255
        %s2384 = smul.addr %s2383, 8
        %s2385 = scalar_lea.vmem %s5, %s2384
      $region52: #{dqn_forward.1} parent=47 // pred_fallthru
        _
    $region48: #{dqn_forward.1} parent=5 // pred_fallthru
      _
  $region6: #{dqn_forward.1} parent=0 // loop_footer
    %s15 = sadd.s32 1, %s11
  $region7: #{dqn_forward.1} parent=0 // loop_footer_branch
    %10 = sbr.rel target = $region3
  $region8: #{dqn_forward.1} parent=0 // loop_exit
    _

</llo_original>
